<compile_context>
chip_gen: v7x
topology: tpu7x:2x2x1
jax: 0.10.0
libtpu: 0.0.40
codegen_flags: <defaults>
</compile_context>

<pallas_src>
import functools

import jax
import jax.numpy as jnp
from jax.experimental import pallas as pl
from jax.experimental.pallas import tpu as pltpu


# ---------------------------------------------------------------------------
# Fused Pallas kernel: whole forward pass, everything VMEM-resident.
# ---------------------------------------------------------------------------

def _fused_forward_kernel(
    v_ref, a_ref,
    e1w_ref, e1b_ref,
    g1w_ref, g1b_ref,
    g2w_ref, g2b_ref,
    g3w_ref, g3b_ref,
    e2w_ref, e2b_ref,
    g4w_ref, g4b_ref,
    g5w_ref, g5b_ref,
    cw_ref, cb_ref,
    o_ref,
):
    f32 = jnp.float32
    bf16 = jnp.bfloat16

    v = v_ref[...]                      # (N, Fin)   bf16
    a = a_ref[...]                      # (L*N, N)   bf16 (0/1 exact)
    n = v.shape[0]
    num_edges = a.shape[0] // n

    def dot32(x, w):
        # bf16 x bf16 -> f32 accumulate on the MXU
        return jnp.dot(x, w, preferred_element_type=f32)

    def relu_cast(x_f32):
        # ReLU in f32 (v5e VPU has no bf16), then narrow for the next matmul
        return jnp.maximum(x_f32, 0.0).astype(bf16)

    def propagate(x_bf16):
        # Stacked edge propagation: ONE matmul for all L edge types.
        return dot32(a, x_bf16).astype(bf16)          # (L*N, f)

    def graphconv(vin, pv, w_ref, b_ref):
        # new_V = [ Vin | A_1@Vin | ... | A_L@Vin ]  (torch cat([I, A]) layout,
        # identity block first) -> ONE full-depth matmul against W.
        new_v = jnp.concatenate(
            [vin] + [pv[l * n:(l + 1) * n, :] for l in range(num_edges)],
            axis=1)                                     # (N, (L+1)*fin)
        return dot32(new_v, w_ref[...]) + b_ref[...].astype(f32)

    def linear(vin, w_ref, b_ref):
        return dot32(vin, w_ref[...]) + b_ref[...].astype(f32)

    # emb1 (+ReLU); dropout = identity (eval)
    emb = relu_cast(linear(v, e1w_ref, e1b_ref))                     # (N, S)
    # gcn1 (+ReLU)
    g1 = relu_cast(graphconv(emb, propagate(emb), g1w_ref, g1b_ref))
    # gcn2 (+ReLU) — keep pv_g1 for reuse in gcn3
    pv_g1 = propagate(g1)
    g2 = relu_cast(graphconv(g1, pv_g1, g2w_ref, g2b_ref))
    # gcn3 on concat([g2, g1]) (+ReLU); reuse A@g1, compute only A@g2
    pv_g2 = propagate(g2)
    vin3 = jnp.concatenate([g2, g1], axis=1)                          # (N, 2S)
    pv3 = jnp.concatenate([pv_g2, pv_g1], axis=1)                     # (L*N, 2S)
    g3 = relu_cast(graphconv(vin3, pv3, g3w_ref, g3b_ref))
    # emb2 on concat([g3, g1]) (+ReLU); use_self_atten=False path
    h = relu_cast(linear(jnp.concatenate([g3, g1], axis=1), e2w_ref, e2b_ref))
    # gcn4 (+ReLU)
    g4 = relu_cast(graphconv(h, propagate(h), g4w_ref, g4b_ref))
    # gcn5 (+ReLU)
    g5 = relu_cast(graphconv(g4, propagate(g4), g5w_ref, g5b_ref))
    # classifier (lane-padded to 128; wrapper slices back)
    out = linear(g5, cw_ref, cb_ref)

    o_ref[...] = out.astype(o_ref.dtype)


# ---------------------------------------------------------------------------
# One-time parameter preparation (outside the hot call path).
# ---------------------------------------------------------------------------

_WEIGHT_ORDER = (
    "emb1_w", "emb1_b", "gcn1_w", "gcn1_b", "gcn2_w", "gcn2_b",
    "gcn3_w", "gcn3_b", "emb2_w", "emb2_b", "gcn4_w", "gcn4_b",
    "gcn5_w", "gcn5_b", "cls_w", "cls_b",
)


def prepare_params(params, out_pad=128):
    """Cast matmul weights to bf16, keep biases f32 (1, C), pad classifier."""
    bf16 = jnp.bfloat16
    output_dim = params["cls_w"].shape[1]
    pad = out_pad - output_dim
    prepared = {}
    for name in ("emb1", "gcn1", "gcn2", "gcn3", "emb2", "gcn4", "gcn5"):
        prepared[name + "_w"] = params[name + "_w"].astype(bf16)
        prepared[name + "_b"] = params[name + "_b"].reshape(1, -1).astype(jnp.float32)
    prepared["cls_w"] = jnp.pad(params["cls_w"], ((0, 0), (0, pad))).astype(bf16)
    prepared["cls_b"] = jnp.pad(params["cls_b"], ((0, pad),)).reshape(1, -1).astype(jnp.float32)
    return prepared


# ---------------------------------------------------------------------------
# Wrapper: one fused pallas_call, batch grid axis (parallel), VMEM blocks.
# ---------------------------------------------------------------------------

@functools.partial(jax.jit, static_argnames=("output_dim",))
def robust_filter_graph_cnn_forward(prepared, V, A, *, output_dim):
    """V: (B, N, Fin), A: (B, N, N, L) -> (B, N, output_dim).  (B must be 1.)"""
    B, n, fin = V.shape
    num_edges = A.shape[-1]
    ln = num_edges * n
    out_pad = prepared["cls_w"].shape[1]

    # bf16 matmul operands; 0/1 adjacency is exactly representable.
    v = V.astype(jnp.bfloat16)
    # Fold torch's cat([I, A]).transpose(1,3).transpose(2,3) into one stacked
    # (L*N, N) propagation matrix; identity block handled analytically in-kernel.
    a = jnp.transpose(A, (0, 3, 1, 2)).reshape(B, ln, n).astype(jnp.bfloat16)

    weights = [prepared[k] for k in _WEIGHT_ORDER]

    in_specs = [
        pl.BlockSpec((None, n, fin), lambda b: (b, 0, 0)),
        pl.BlockSpec((None, ln, n), lambda b: (b, 0, 0)),
    ] + [pl.BlockSpec(w.shape, lambda b: (0, 0)) for w in weights]
    out_spec = pl.BlockSpec((None, n, out_pad), lambda b: (b, 0, 0))

    out_padded = pl.pallas_call(
        _fused_forward_kernel,
        grid=(B,),
        out_shape=jax.ShapeDtypeStruct((B, n, out_pad), jnp.float32),
        in_specs=in_specs,
        out_specs=out_spec,
        compiler_params=pltpu.CompilerParams(
            dimension_semantics=("parallel",),      # 2nd TC on v7x if B>1
            vmem_limit_bytes=32 * 1024 * 1024,
        ),
    )(v, a, *weights)

    return out_padded[:, :, :output_dim]


# ---------------------------------------------------------------------------
# Pure-JAX reference (mirrors the torch module literally, with concats).
# Weights / V are rounded through bf16 so only activation rounding and MXU
# accumulation order differ from the kernel.
# ---------------------------------------------------------------------------

def reference_forward(params, V, A):
    r = lambda x: x.astype(jnp.bfloat16).astype(jnp.float32)
    v = r(V[0])                                               # (N, Fin)
    n = v.shape[0]
    eye = jnp.eye(n, dtype=jnp.float32)[:, :, None]           # (N, N, 1)
    a_full = jnp.concatenate([eye, A[0].astype(jnp.float32)], axis=-1)  # (N,N,L+1)
    a_t = jnp.transpose(a_full, (2, 0, 1))                    # (L+1, N, N)

    def gconv(x, w, b):
        new_v = jnp.einsum("lij,jf->ilf", a_t, x).reshape(n, -1)
        return new_v @ r(w) + b

    def lin(x, w, b):
        return x @ r(w) + b

    relu = lambda x: jnp.maximum(x, 0.0)
    emb = relu(lin(v, params["emb1_w"], params["emb1_b"]))
    g1 = relu(gconv(emb, params["gcn1_w"], params["gcn1_b"]))
    g2 = relu(gconv(g1, params["gcn2_w"], params["gcn2_b"]))
    g3 = relu(gconv(jnp.concatenate([g2, g1], -1), params["gcn3_w"], params["gcn3_b"]))
    h = relu(lin(jnp.concatenate([g3, g1], -1), params["emb2_w"], params["emb2_b"]))
    g4 = relu(gconv(h, params["gcn4_w"], params["gcn4_b"]))
    g5 = relu(gconv(g4, params["gcn5_w"], params["gcn5_b"]))
    out = lin(g5, params["cls_w"], params["cls_b"])
    return out[None]


# ---------------------------------------------------------------------------
# Parameter construction (deterministic, xavier-like normal init)
# ---------------------------------------------------------------------------

def _xavier_normal(key, fan_in, fan_out):
    std = (2.0 / (fan_in + fan_out)) ** 0.5
    return std * jax.random.normal(key, (fan_in, fan_out), dtype=jnp.float32)


def _small_bias(key, dim):
    return 0.0001 + 5e-5 * jax.random.normal(key, (dim,), dtype=jnp.float32)


def init_params(key, input_dim, output_dim, num_edges, net_size):
    half = net_size // 2
    ks = jax.random.split(key, 16)
    L1 = num_edges + 1
    return {
        "emb1_w": _xavier_normal(ks[0], input_dim, net_size),
        "emb1_b": _small_bias(ks[1], net_size),
        "gcn1_w": _xavier_normal(ks[2], net_size * L1, net_size),
        "gcn1_b": _small_bias(ks[3], net_size),
        "gcn2_w": _xavier_normal(ks[4], net_size * L1, net_size),
        "gcn2_b": _small_bias(ks[5], net_size),
        "gcn3_w": _xavier_normal(ks[6], net_size * 2 * L1, net_size),
        "gcn3_b": _small_bias(ks[7], net_size),
        "emb2_w": _xavier_normal(ks[8], net_size * 2, half),
        "emb2_b": _small_bias(ks[9], half),
        "gcn4_w": _xavier_normal(ks[10], half * L1, half),
        "gcn4_b": _small_bias(ks[11], half),
        "gcn5_w": _xavier_normal(ks[12], half * L1, half),
        "gcn5_b": _small_bias(ks[13], half),
        "cls_w": _xavier_normal(ks[14], half, output_dim),
        "cls_b": _small_bias(ks[15], output_dim),
    }


# ---------------------------------------------------------------------------
# Main
# ---------------------------------------------------------------------------

if __name__ == "__main__":
    # Small shapes consistent with the module.  B must be 1: the torch
    # GraphConv broadcast (A.view(B*(L+1),N,N) @ V.view(-1,N,F)) only works
    # for B == 1.
    B, N = 1, 16
    input_dim, output_dim = 16, 8
    num_edges = 3
    net_size = 32

    # Alignment guards: keep pv row-block / lane-concat offsets tile-aligned.
    assert B == 1, "module semantics only defined for batch size 1"
    assert N % 8 == 0 and input_dim % 8 == 0
    assert net_size % 16 == 0 and (net_size // 2) % 8 == 0

    key = jax.random.PRNGKey(0)
    k_par, k_v, k_a = jax.random.split(key, 3)

    params = init_params(k_par, input_dim, output_dim, num_edges, net_size)
    prepared = prepare_params(params)                 # bf16 weights, padded cls

    V = jax.random.normal(k_v, (B, N, input_dim), dtype=jnp.float32)
    # binary-ish adjacency tensors per edge type (exactly representable in bf16)
    A = (jax.random.uniform(k_a, (B, N, N, num_edges)) > 0.7).astype(jnp.float32)

    out = robust_filter_graph_cnn_forward(prepared, V, A, output_dim=output_dim)
    out = jax.block_until_ready(out)

    assert out.shape == (B, N, output_dim), out.shape
    assert bool(jnp.all(jnp.isfinite(out)))

    # correctness vs. literal (concat-based) reference; tolerance covers the
    # bf16 activation rounding between layers + MXU accumulation order.
    ref = jax.block_until_ready(reference_forward(params, V, A))
    scale = float(jnp.max(jnp.abs(ref))) + 1.0
    max_err = float(jnp.max(jnp.abs(out - ref)))
    assert max_err / scale < 5e-2, (max_err, scale)

    print("KERNEL_OK")
</pallas_src>

<mosaic_0001>
module attributes {stable_mosaic.version = 11 : i64} {
  func.func @_fused_forward_kernel(%arg0: i32, %arg1: memref<1x16x16xbf16, #tpu.memory_space<vmem>>, %arg2: memref<1x48x16xbf16, #tpu.memory_space<vmem>>, %arg3: memref<16x32xbf16, #tpu.memory_space<vmem>>, %arg4: memref<1x32xf32, #tpu.memory_space<vmem>>, %arg5: memref<128x32xbf16, #tpu.memory_space<vmem>>, %arg6: memref<1x32xf32, #tpu.memory_space<vmem>>, %arg7: memref<128x32xbf16, #tpu.memory_space<vmem>>, %arg8: memref<1x32xf32, #tpu.memory_space<vmem>>, %arg9: memref<256x32xbf16, #tpu.memory_space<vmem>>, %arg10: memref<1x32xf32, #tpu.memory_space<vmem>>, %arg11: memref<64x16xbf16, #tpu.memory_space<vmem>>, %arg12: memref<1x16xf32, #tpu.memory_space<vmem>>, %arg13: memref<64x16xbf16, #tpu.memory_space<vmem>>, %arg14: memref<1x16xf32, #tpu.memory_space<vmem>>, %arg15: memref<64x16xbf16, #tpu.memory_space<vmem>>, %arg16: memref<1x16xf32, #tpu.memory_space<vmem>>, %arg17: memref<16x128xbf16, #tpu.memory_space<vmem>>, %arg18: memref<1x128xf32, #tpu.memory_space<vmem>>, %arg19: memref<1x16x128xf32, #tpu.memory_space<vmem>>) attributes {dimension_semantics = [#tpu.dimension_semantics<parallel>], iteration_bounds = array<i64: 1>, scalar_prefetch = 0 : i64, scratch_operands = 0 : i64, tpu.core_type = #tpu.core_type<tc>, window_params = [{transform_indices = @transform_0, window_bounds = array<i64: 1, 16, 16>}, {transform_indices = @transform_1, window_bounds = array<i64: 1, 48, 16>}, {pipeline_mode = #tpu.pipeline_mode<synchronous>, transform_indices = @transform_2, window_bounds = array<i64: 16, 32>}, {pipeline_mode = #tpu.pipeline_mode<synchronous>, transform_indices = @transform_3, window_bounds = array<i64: 1, 32>}, {pipeline_mode = #tpu.pipeline_mode<synchronous>, transform_indices = @transform_4, window_bounds = array<i64: 128, 32>}, {pipeline_mode = #tpu.pipeline_mode<synchronous>, transform_indices = @transform_5, window_bounds = array<i64: 1, 32>}, {pipeline_mode = #tpu.pipeline_mode<synchronous>, transform_indices = @transform_6, window_bounds = array<i64: 128, 32>}, {pipeline_mode = #tpu.pipeline_mode<synchronous>, transform_indices = @transform_7, window_bounds = array<i64: 1, 32>}, {pipeline_mode = #tpu.pipeline_mode<synchronous>, transform_indices = @transform_8, window_bounds = array<i64: 256, 32>}, {pipeline_mode = #tpu.pipeline_mode<synchronous>, transform_indices = @transform_9, window_bounds = array<i64: 1, 32>}, {pipeline_mode = #tpu.pipeline_mode<synchronous>, transform_indices = @transform_10, window_bounds = array<i64: 64, 16>}, {pipeline_mode = #tpu.pipeline_mode<synchronous>, transform_indices = @transform_11, window_bounds = array<i64: 1, 16>}, {pipeline_mode = #tpu.pipeline_mode<synchronous>, transform_indices = @transform_12, window_bounds = array<i64: 64, 16>}, {pipeline_mode = #tpu.pipeline_mode<synchronous>, transform_indices = @transform_13, window_bounds = array<i64: 1, 16>}, {pipeline_mode = #tpu.pipeline_mode<synchronous>, transform_indices = @transform_14, window_bounds = array<i64: 64, 16>}, {pipeline_mode = #tpu.pipeline_mode<synchronous>, transform_indices = @transform_15, window_bounds = array<i64: 1, 16>}, {pipeline_mode = #tpu.pipeline_mode<synchronous>, transform_indices = @transform_16, window_bounds = array<i64: 16, 128>}, {pipeline_mode = #tpu.pipeline_mode<synchronous>, transform_indices = @transform_17, window_bounds = array<i64: 1, 128>}, {transform_indices = @transform_18, window_bounds = array<i64: 1, 16, 128>}]} {
    %c0 = arith.constant 0 : index
    %c0_0 = arith.constant 0 : index
    %c0_1 = arith.constant 0 : index
    %0 = vector.load %arg1[%c0, %c0_0, %c0_1] : memref<1x16x16xbf16, #tpu.memory_space<vmem>>, vector<1x16x16xbf16>
    %1 = vector.shape_cast %0 : vector<1x16x16xbf16> to vector<16x16xbf16>
    %c0_2 = arith.constant 0 : index
    %c0_3 = arith.constant 0 : index
    %c0_4 = arith.constant 0 : index
    %2 = vector.load %arg2[%c0_2, %c0_3, %c0_4] : memref<1x48x16xbf16, #tpu.memory_space<vmem>>, vector<1x48x16xbf16>
    %3 = vector.shape_cast %2 : vector<1x48x16xbf16> to vector<48x16xbf16>
    %c0_5 = arith.constant 0 : index
    %c0_6 = arith.constant 0 : index
    %4 = vector.load %arg3[%c0_5, %c0_6] : memref<16x32xbf16, #tpu.memory_space<vmem>>, vector<16x32xbf16>
    %cst = arith.constant dense<0.000000e+00> : vector<16x32xf32>
    %5 = tpu.matmul %1, %4, %cst {dimension_numbers = #tpu.dot_dimension_numbers<[1], [0], [0], [1], [0, 0, 1, 1], [], []>} : vector<16x16xbf16>, vector<16x32xbf16>, vector<16x32xf32> -> vector<16x32xf32>
    %c0_7 = arith.constant 0 : index
    %c0_8 = arith.constant 0 : index
    %6 = vector.load %arg4[%c0_7, %c0_8] : memref<1x32xf32, #tpu.memory_space<vmem>>, vector<1x32xf32>
    %7 = vector.broadcast %6 : vector<1x32xf32> to vector<16x32xf32>
    %8 = arith.addf %5, %7 : vector<16x32xf32>
    %cst_9 = arith.constant 0.000000e+00 : f32
    %9 = vector.broadcast %cst_9 : f32 to vector<16x32xf32>
    %10 = arith.maximumf %8, %9 : vector<16x32xf32>
    %11 = arith.truncf %10 : vector<16x32xf32> to vector<16x32xbf16>
    %cst_10 = arith.constant dense<0.000000e+00> : vector<48x32xf32>
    %12 = tpu.matmul %3, %11, %cst_10 {dimension_numbers = #tpu.dot_dimension_numbers<[1], [0], [0], [1], [0, 0, 1, 1], [], []>} : vector<48x16xbf16>, vector<16x32xbf16>, vector<48x32xf32> -> vector<48x32xf32>
    %13 = arith.truncf %12 : vector<48x32xf32> to vector<48x32xbf16>
    %14 = vector.extract_strided_slice %13 {offsets = [0, 0], sizes = [16, 32], strides = [1, 1]} : vector<48x32xbf16> to vector<16x32xbf16>
    %15 = vector.extract_strided_slice %13 {offsets = [16, 0], sizes = [16, 32], strides = [1, 1]} : vector<48x32xbf16> to vector<16x32xbf16>
    %16 = vector.extract_strided_slice %13 {offsets = [32, 0], sizes = [16, 32], strides = [1, 1]} : vector<48x32xbf16> to vector<16x32xbf16>
    %17 = tpu.concatenate %11, %14, %15, %16 in 1 : vector<16x32xbf16>, vector<16x32xbf16>, vector<16x32xbf16>, vector<16x32xbf16> -> vector<16x128xbf16>
    %c0_11 = arith.constant 0 : index
    %c0_12 = arith.constant 0 : index
    %18 = vector.load %arg5[%c0_11, %c0_12] : memref<128x32xbf16, #tpu.memory_space<vmem>>, vector<128x32xbf16>
    %cst_13 = arith.constant dense<0.000000e+00> : vector<16x32xf32>
    %19 = tpu.matmul %17, %18, %cst_13 {dimension_numbers = #tpu.dot_dimension_numbers<[1], [0], [0], [1], [0, 0, 1, 1], [], []>} : vector<16x128xbf16>, vector<128x32xbf16>, vector<16x32xf32> -> vector<16x32xf32>
    %c0_14 = arith.constant 0 : index
    %c0_15 = arith.constant 0 : index
    %20 = vector.load %arg6[%c0_14, %c0_15] : memref<1x32xf32, #tpu.memory_space<vmem>>, vector<1x32xf32>
    %21 = vector.broadcast %20 : vector<1x32xf32> to vector<16x32xf32>
    %22 = arith.addf %19, %21 : vector<16x32xf32>
    %cst_16 = arith.constant 0.000000e+00 : f32
    %23 = vector.broadcast %cst_16 : f32 to vector<16x32xf32>
    %24 = arith.maximumf %22, %23 : vector<16x32xf32>
    %25 = arith.truncf %24 : vector<16x32xf32> to vector<16x32xbf16>
    %cst_17 = arith.constant dense<0.000000e+00> : vector<48x32xf32>
    %26 = tpu.matmul %3, %25, %cst_17 {dimension_numbers = #tpu.dot_dimension_numbers<[1], [0], [0], [1], [0, 0, 1, 1], [], []>} : vector<48x16xbf16>, vector<16x32xbf16>, vector<48x32xf32> -> vector<48x32xf32>
    %27 = arith.truncf %26 : vector<48x32xf32> to vector<48x32xbf16>
    %28 = vector.extract_strided_slice %27 {offsets = [0, 0], sizes = [16, 32], strides = [1, 1]} : vector<48x32xbf16> to vector<16x32xbf16>
    %29 = vector.extract_strided_slice %27 {offsets = [16, 0], sizes = [16, 32], strides = [1, 1]} : vector<48x32xbf16> to vector<16x32xbf16>
    %30 = vector.extract_strided_slice %27 {offsets = [32, 0], sizes = [16, 32], strides = [1, 1]} : vector<48x32xbf16> to vector<16x32xbf16>
    %31 = tpu.concatenate %25, %28, %29, %30 in 1 : vector<16x32xbf16>, vector<16x32xbf16>, vector<16x32xbf16>, vector<16x32xbf16> -> vector<16x128xbf16>
    %c0_18 = arith.constant 0 : index
    %c0_19 = arith.constant 0 : index
    %32 = vector.load %arg7[%c0_18, %c0_19] : memref<128x32xbf16, #tpu.memory_space<vmem>>, vector<128x32xbf16>
    %cst_20 = arith.constant dense<0.000000e+00> : vector<16x32xf32>
    %33 = tpu.matmul %31, %32, %cst_20 {dimension_numbers = #tpu.dot_dimension_numbers<[1], [0], [0], [1], [0, 0, 1, 1], [], []>} : vector<16x128xbf16>, vector<128x32xbf16>, vector<16x32xf32> -> vector<16x32xf32>
    %c0_21 = arith.constant 0 : index
    %c0_22 = arith.constant 0 : index
    %34 = vector.load %arg8[%c0_21, %c0_22] : memref<1x32xf32, #tpu.memory_space<vmem>>, vector<1x32xf32>
    %35 = vector.broadcast %34 : vector<1x32xf32> to vector<16x32xf32>
    %36 = arith.addf %33, %35 : vector<16x32xf32>
    %cst_23 = arith.constant 0.000000e+00 : f32
    %37 = vector.broadcast %cst_23 : f32 to vector<16x32xf32>
    %38 = arith.maximumf %36, %37 : vector<16x32xf32>
    %39 = arith.truncf %38 : vector<16x32xf32> to vector<16x32xbf16>
    %cst_24 = arith.constant dense<0.000000e+00> : vector<48x32xf32>
    %40 = tpu.matmul %3, %39, %cst_24 {dimension_numbers = #tpu.dot_dimension_numbers<[1], [0], [0], [1], [0, 0, 1, 1], [], []>} : vector<48x16xbf16>, vector<16x32xbf16>, vector<48x32xf32> -> vector<48x32xf32>
    %41 = arith.truncf %40 : vector<48x32xf32> to vector<48x32xbf16>
    %42 = tpu.concatenate %39, %25 in 1 : vector<16x32xbf16>, vector<16x32xbf16> -> vector<16x64xbf16>
    %43 = tpu.concatenate %41, %27 in 1 : vector<48x32xbf16>, vector<48x32xbf16> -> vector<48x64xbf16>
    %44 = vector.extract_strided_slice %43 {offsets = [0, 0], sizes = [16, 64], strides = [1, 1]} : vector<48x64xbf16> to vector<16x64xbf16>
    %45 = vector.extract_strided_slice %43 {offsets = [16, 0], sizes = [16, 64], strides = [1, 1]} : vector<48x64xbf16> to vector<16x64xbf16>
    %46 = vector.extract_strided_slice %43 {offsets = [32, 0], sizes = [16, 64], strides = [1, 1]} : vector<48x64xbf16> to vector<16x64xbf16>
    %47 = tpu.concatenate %42, %44, %45, %46 in 1 : vector<16x64xbf16>, vector<16x64xbf16>, vector<16x64xbf16>, vector<16x64xbf16> -> vector<16x256xbf16>
    %c0_25 = arith.constant 0 : index
    %c0_26 = arith.constant 0 : index
    %48 = vector.load %arg9[%c0_25, %c0_26] : memref<256x32xbf16, #tpu.memory_space<vmem>>, vector<256x32xbf16>
    %cst_27 = arith.constant dense<0.000000e+00> : vector<16x32xf32>
    %49 = tpu.matmul %47, %48, %cst_27 {dimension_numbers = #tpu.dot_dimension_numbers<[1], [0], [0], [1], [0, 0, 1, 1], [], []>} : vector<16x256xbf16>, vector<256x32xbf16>, vector<16x32xf32> -> vector<16x32xf32>
    %c0_28 = arith.constant 0 : index
    %c0_29 = arith.constant 0 : index
    %50 = vector.load %arg10[%c0_28, %c0_29] : memref<1x32xf32, #tpu.memory_space<vmem>>, vector<1x32xf32>
    %51 = vector.broadcast %50 : vector<1x32xf32> to vector<16x32xf32>
    %52 = arith.addf %49, %51 : vector<16x32xf32>
    %cst_30 = arith.constant 0.000000e+00 : f32
    %53 = vector.broadcast %cst_30 : f32 to vector<16x32xf32>
    %54 = arith.maximumf %52, %53 : vector<16x32xf32>
    %55 = arith.truncf %54 : vector<16x32xf32> to vector<16x32xbf16>
    %56 = tpu.concatenate %55, %25 in 1 : vector<16x32xbf16>, vector<16x32xbf16> -> vector<16x64xbf16>
    %c0_31 = arith.constant 0 : index
    %c0_32 = arith.constant 0 : index
    %57 = vector.load %arg11[%c0_31, %c0_32] : memref<64x16xbf16, #tpu.memory_space<vmem>>, vector<64x16xbf16>
    %cst_33 = arith.constant dense<0.000000e+00> : vector<16x16xf32>
    %58 = tpu.matmul %56, %57, %cst_33 {dimension_numbers = #tpu.dot_dimension_numbers<[1], [0], [0], [1], [0, 0, 1, 1], [], []>} : vector<16x64xbf16>, vector<64x16xbf16>, vector<16x16xf32> -> vector<16x16xf32>
    %c0_34 = arith.constant 0 : index
    %c0_35 = arith.constant 0 : index
    %59 = vector.load %arg12[%c0_34, %c0_35] : memref<1x16xf32, #tpu.memory_space<vmem>>, vector<1x16xf32>
    %60 = vector.broadcast %59 : vector<1x16xf32> to vector<16x16xf32>
    %61 = arith.addf %58, %60 : vector<16x16xf32>
    %cst_36 = arith.constant 0.000000e+00 : f32
    %62 = vector.broadcast %cst_36 : f32 to vector<16x16xf32>
    %63 = arith.maximumf %61, %62 : vector<16x16xf32>
    %64 = arith.truncf %63 : vector<16x16xf32> to vector<16x16xbf16>
    %cst_37 = arith.constant dense<0.000000e+00> : vector<48x16xf32>
    %65 = tpu.matmul %3, %64, %cst_37 {dimension_numbers = #tpu.dot_dimension_numbers<[1], [0], [0], [1], [0, 0, 1, 1], [], []>} : vector<48x16xbf16>, vector<16x16xbf16>, vector<48x16xf32> -> vector<48x16xf32>
    %66 = arith.truncf %65 : vector<48x16xf32> to vector<48x16xbf16>
    %67 = vector.extract_strided_slice %66 {offsets = [0, 0], sizes = [16, 16], strides = [1, 1]} : vector<48x16xbf16> to vector<16x16xbf16>
    %68 = vector.extract_strided_slice %66 {offsets = [16, 0], sizes = [16, 16], strides = [1, 1]} : vector<48x16xbf16> to vector<16x16xbf16>
    %69 = vector.extract_strided_slice %66 {offsets = [32, 0], sizes = [16, 16], strides = [1, 1]} : vector<48x16xbf16> to vector<16x16xbf16>
    %70 = tpu.concatenate %64, %67, %68, %69 in 1 : vector<16x16xbf16>, vector<16x16xbf16>, vector<16x16xbf16>, vector<16x16xbf16> -> vector<16x64xbf16>
    %c0_38 = arith.constant 0 : index
    %c0_39 = arith.constant 0 : index
    %71 = vector.load %arg13[%c0_38, %c0_39] : memref<64x16xbf16, #tpu.memory_space<vmem>>, vector<64x16xbf16>
    %cst_40 = arith.constant dense<0.000000e+00> : vector<16x16xf32>
    %72 = tpu.matmul %70, %71, %cst_40 {dimension_numbers = #tpu.dot_dimension_numbers<[1], [0], [0], [1], [0, 0, 1, 1], [], []>} : vector<16x64xbf16>, vector<64x16xbf16>, vector<16x16xf32> -> vector<16x16xf32>
    %c0_41 = arith.constant 0 : index
    %c0_42 = arith.constant 0 : index
    %73 = vector.load %arg14[%c0_41, %c0_42] : memref<1x16xf32, #tpu.memory_space<vmem>>, vector<1x16xf32>
    %74 = vector.broadcast %73 : vector<1x16xf32> to vector<16x16xf32>
    %75 = arith.addf %72, %74 : vector<16x16xf32>
    %cst_43 = arith.constant 0.000000e+00 : f32
    %76 = vector.broadcast %cst_43 : f32 to vector<16x16xf32>
    %77 = arith.maximumf %75, %76 : vector<16x16xf32>
    %78 = arith.truncf %77 : vector<16x16xf32> to vector<16x16xbf16>
    %cst_44 = arith.constant dense<0.000000e+00> : vector<48x16xf32>
    %79 = tpu.matmul %3, %78, %cst_44 {dimension_numbers = #tpu.dot_dimension_numbers<[1], [0], [0], [1], [0, 0, 1, 1], [], []>} : vector<48x16xbf16>, vector<16x16xbf16>, vector<48x16xf32> -> vector<48x16xf32>
    %80 = arith.truncf %79 : vector<48x16xf32> to vector<48x16xbf16>
    %81 = vector.extract_strided_slice %80 {offsets = [0, 0], sizes = [16, 16], strides = [1, 1]} : vector<48x16xbf16> to vector<16x16xbf16>
    %82 = vector.extract_strided_slice %80 {offsets = [16, 0], sizes = [16, 16], strides = [1, 1]} : vector<48x16xbf16> to vector<16x16xbf16>
    %83 = vector.extract_strided_slice %80 {offsets = [32, 0], sizes = [16, 16], strides = [1, 1]} : vector<48x16xbf16> to vector<16x16xbf16>
    %84 = tpu.concatenate %78, %81, %82, %83 in 1 : vector<16x16xbf16>, vector<16x16xbf16>, vector<16x16xbf16>, vector<16x16xbf16> -> vector<16x64xbf16>
    %c0_45 = arith.constant 0 : index
    %c0_46 = arith.constant 0 : index
    %85 = vector.load %arg15[%c0_45, %c0_46] : memref<64x16xbf16, #tpu.memory_space<vmem>>, vector<64x16xbf16>
    %cst_47 = arith.constant dense<0.000000e+00> : vector<16x16xf32>
    %86 = tpu.matmul %84, %85, %cst_47 {dimension_numbers = #tpu.dot_dimension_numbers<[1], [0], [0], [1], [0, 0, 1, 1], [], []>} : vector<16x64xbf16>, vector<64x16xbf16>, vector<16x16xf32> -> vector<16x16xf32>
    %c0_48 = arith.constant 0 : index
    %c0_49 = arith.constant 0 : index
    %87 = vector.load %arg16[%c0_48, %c0_49] : memref<1x16xf32, #tpu.memory_space<vmem>>, vector<1x16xf32>
    %88 = vector.broadcast %87 : vector<1x16xf32> to vector<16x16xf32>
    %89 = arith.addf %86, %88 : vector<16x16xf32>
    %cst_50 = arith.constant 0.000000e+00 : f32
    %90 = vector.broadcast %cst_50 : f32 to vector<16x16xf32>
    %91 = arith.maximumf %89, %90 : vector<16x16xf32>
    %92 = arith.truncf %91 : vector<16x16xf32> to vector<16x16xbf16>
    %c0_51 = arith.constant 0 : index
    %c0_52 = arith.constant 0 : index
    %93 = vector.load %arg17[%c0_51, %c0_52] : memref<16x128xbf16, #tpu.memory_space<vmem>>, vector<16x128xbf16>
    %cst_53 = arith.constant dense<0.000000e+00> : vector<16x128xf32>
    %94 = tpu.matmul %92, %93, %cst_53 {dimension_numbers = #tpu.dot_dimension_numbers<[1], [0], [0], [1], [0, 0, 1, 1], [], []>} : vector<16x16xbf16>, vector<16x128xbf16>, vector<16x128xf32> -> vector<16x128xf32>
    %c0_54 = arith.constant 0 : index
    %c0_55 = arith.constant 0 : index
    %95 = vector.load %arg18[%c0_54, %c0_55] : memref<1x128xf32, #tpu.memory_space<vmem>>, vector<1x128xf32>
    %96 = vector.broadcast %95 : vector<1x128xf32> to vector<16x128xf32>
    %97 = arith.addf %94, %96 : vector<16x128xf32>
    %c0_56 = arith.constant 0 : index
    %c0_57 = arith.constant 0 : index
    %c0_58 = arith.constant 0 : index
    %98 = vector.load %arg19[%c0_56, %c0_57, %c0_58] : memref<1x16x128xf32, #tpu.memory_space<vmem>>, vector<1x16x128xf32>
    %99 = vector.shape_cast %98 : vector<1x16x128xf32> to vector<16x128xf32>
    %100 = vector.shape_cast %97 : vector<16x128xf32> to vector<1x16x128xf32>
    tpu.vector_store %arg19[%c0_56, %c0_57, %c0_58], %100 {strides = array<i32>} : memref<1x16x128xf32, #tpu.memory_space<vmem>>, vector<1x16x128xf32>,
    return
  }
  func.func @transform_0(%arg0: i32) -> (i32, i32, i32) {
    %c0_i32 = arith.constant 0 : i32
    %c0_i32_0 = arith.constant 0 : i32
    %c0_i32_1 = arith.constant 0 : i32
    return %arg0, %c0_i32, %c0_i32_0 : i32, i32, i32
  }
  func.func @transform_1(%arg0: i32) -> (i32, i32, i32) {
    %c0_i32 = arith.constant 0 : i32
    %c0_i32_0 = arith.constant 0 : i32
    %c0_i32_1 = arith.constant 0 : i32
    return %arg0, %c0_i32, %c0_i32_0 : i32, i32, i32
  }
  func.func @transform_2(%arg0: i32) -> (i32, i32) {
    %c0_i32 = arith.constant 0 : i32
    %c0_i32_0 = arith.constant 0 : i32
    %c0_i32_1 = arith.constant 0 : i32
    return %c0_i32, %c0_i32_0 : i32, i32
  }
  func.func @transform_3(%arg0: i32) -> (i32, i32) {
    %c0_i32 = arith.constant 0 : i32
    %c0_i32_0 = arith.constant 0 : i32
    %c0_i32_1 = arith.constant 0 : i32
    return %c0_i32, %c0_i32_0 : i32, i32
  }
  func.func @transform_4(%arg0: i32) -> (i32, i32) {
    %c0_i32 = arith.constant 0 : i32
    %c0_i32_0 = arith.constant 0 : i32
    %c0_i32_1 = arith.constant 0 : i32
    return %c0_i32, %c0_i32_0 : i32, i32
  }
  func.func @transform_5(%arg0: i32) -> (i32, i32) {
    %c0_i32 = arith.constant 0 : i32
    %c0_i32_0 = arith.constant 0 : i32
    %c0_i32_1 = arith.constant 0 : i32
    return %c0_i32, %c0_i32_0 : i32, i32
  }
  func.func @transform_6(%arg0: i32) -> (i32, i32) {
    %c0_i32 = arith.constant 0 : i32
    %c0_i32_0 = arith.constant 0 : i32
    %c0_i32_1 = arith.constant 0 : i32
    return %c0_i32, %c0_i32_0 : i32, i32
  }
  func.func @transform_7(%arg0: i32) -> (i32, i32) {
    %c0_i32 = arith.constant 0 : i32
    %c0_i32_0 = arith.constant 0 : i32
    %c0_i32_1 = arith.constant 0 : i32
    return %c0_i32, %c0_i32_0 : i32, i32
  }
  func.func @transform_8(%arg0: i32) -> (i32, i32) {
    %c0_i32 = arith.constant 0 : i32
    %c0_i32_0 = arith.constant 0 : i32
    %c0_i32_1 = arith.constant 0 : i32
    return %c0_i32, %c0_i32_0 : i32, i32
  }
  func.func @transform_9(%arg0: i32) -> (i32, i32) {
    %c0_i32 = arith.constant 0 : i32
    %c0_i32_0 = arith.constant 0 : i32
    %c0_i32_1 = arith.constant 0 : i32
    return %c0_i32, %c0_i32_0 : i32, i32
  }
  func.func @transform_10(%arg0: i32) -> (i32, i32) {
    %c0_i32 = arith.constant 0 : i32
    %c0_i32_0 = arith.constant 0 : i32
    %c0_i32_1 = arith.constant 0 : i32
    return %c0_i32, %c0_i32_0 : i32, i32
  }
  func.func @transform_11(%arg0: i32) -> (i32, i32) {
    %c0_i32 = arith.constant 0 : i32
    %c0_i32_0 = arith.constant 0 : i32
    %c0_i32_1 = arith.constant 0 : i32
    return %c0_i32, %c0_i32_0 : i32, i32
  }
  func.func @transform_12(%arg0: i32) -> (i32, i32) {
    %c0_i32 = arith.constant 0 : i32
    %c0_i32_0 = arith.constant 0 : i32
    %c0_i32_1 = arith.constant 0 : i32
    return %c0_i32, %c0_i32_0 : i32, i32
  }
  func.func @transform_13(%arg0: i32) -> (i32, i32) {
    %c0_i32 = arith.constant 0 : i32
    %c0_i32_0 = arith.constant 0 : i32
    %c0_i32_1 = arith.constant 0 : i32
    return %c0_i32, %c0_i32_0 : i32, i32
  }
  func.func @transform_14(%arg0: i32) -> (i32, i32) {
    %c0_i32 = arith.constant 0 : i32
    %c0_i32_0 = arith.constant 0 : i32
    %c0_i32_1 = arith.constant 0 : i32
    return %c0_i32, %c0_i32_0 : i32, i32
  }
  func.func @transform_15(%arg0: i32) -> (i32, i32) {
    %c0_i32 = arith.constant 0 : i32
    %c0_i32_0 = arith.constant 0 : i32
    %c0_i32_1 = arith.constant 0 : i32
    return %c0_i32, %c0_i32_0 : i32, i32
  }
  func.func @transform_16(%arg0: i32) -> (i32, i32) {
    %c0_i32 = arith.constant 0 : i32
    %c0_i32_0 = arith.constant 0 : i32
    %c0_i32_1 = arith.constant 0 : i32
    return %c0_i32, %c0_i32_0 : i32, i32
  }
  func.func @transform_17(%arg0: i32) -> (i32, i32) {
    %c0_i32 = arith.constant 0 : i32
    %c0_i32_0 = arith.constant 0 : i32
    %c0_i32_1 = arith.constant 0 : i32
    return %c0_i32, %c0_i32_0 : i32, i32
  }
  func.func @transform_18(%arg0: i32) -> (i32, i32, i32) {
    %c0_i32 = arith.constant 0 : i32
    %c0_i32_0 = arith.constant 0 : i32
    %c0_i32_1 = arith.constant 0 : i32
    return %arg0, %c0_i32, %c0_i32_0 : i32, i32, i32
  }
}

</mosaic_0001>

<llo_original>
// kernel: robust_filter_graph_cnn_forward.1
$region0: #{robust_filter_graph_cnn_forward.1}
  #allocation0 [shape = 'u32[]', space=smem, size = 0x4, offset = 0x4, fixed_abs, tag = 'smem constant byte address 0x4 - core index']
  #allocation1 [shape = 'u32[144,128]{1,0:T(1,128)}', space=vmem, size = 0x12000, scoped, tag = 'internal scratch']
  %s0 = inlined_call_operand.vmem [shape: bf16[1,16,16], index: 0, kind: input, shape index: {}]
  %s1 = inlined_call_operand.vmem [shape: bf16[1,48,16], index: 1, kind: input, shape index: {}]
  %s2 = inlined_call_operand.vmem [shape: bf16[16,32], index: 2, kind: input, shape index: {}]
  %s3 = inlined_call_operand.vmem [shape: f32[1,32], index: 3, kind: input, shape index: {}]
  %s4 = inlined_call_operand.vmem [shape: bf16[128,32], index: 4, kind: input, shape index: {}]
  %s5 = inlined_call_operand.vmem [shape: f32[1,32], index: 5, kind: input, shape index: {}]
  %s6 = inlined_call_operand.vmem [shape: bf16[128,32], index: 6, kind: input, shape index: {}]
  %s7 = inlined_call_operand.vmem [shape: f32[1,32], index: 7, kind: input, shape index: {}]
  %s8 = inlined_call_operand.vmem [shape: bf16[256,32], index: 8, kind: input, shape index: {}]
  %s9 = inlined_call_operand.vmem [shape: f32[1,32], index: 9, kind: input, shape index: {}]
  %s10 = inlined_call_operand.vmem [shape: bf16[64,16], index: 10, kind: input, shape index: {}]
  %s11 = inlined_call_operand.vmem [shape: f32[1,16], index: 11, kind: input, shape index: {}]
  %s12 = inlined_call_operand.vmem [shape: bf16[64,16], index: 12, kind: input, shape index: {}]
  %s13 = inlined_call_operand.vmem [shape: f32[1,16], index: 13, kind: input, shape index: {}]
  %s14 = inlined_call_operand.vmem [shape: bf16[64,16], index: 14, kind: input, shape index: {}]
  %s15 = inlined_call_operand.vmem [shape: f32[1,16], index: 15, kind: input, shape index: {}]
  %s16 = inlined_call_operand.vmem [shape: bf16[16,128], index: 16, kind: input, shape index: {}]
  %s17 = inlined_call_operand.vmem [shape: f32[1,128], index: 17, kind: input, shape index: {}]
  %s18 = inlined_call_operand.vmem [shape: f32[1,16,128], index: 18, kind: output, shape index: {}]
  %s19 = sld [smem:[#allocation0]]
  $region82: #{robust_filter_graph_cnn_forward.1} parent=0
    _
  %s21 = ssub.s32 1, %s19
  %s22 = scalar_select 0, %s21, %s19
  // Predicated region
  $region2: #{robust_filter_graph_cnn_forward.1} parent=0 // pred_check
    _
  $region3: #{robust_filter_graph_cnn_forward.1} parent=0 // pred_check_branch
    %24 = sbr.rel (0) target = $region5
  $region4: #{robust_filter_graph_cnn_forward.1} parent=0 // pred_region
    _
  $region5: #{robust_filter_graph_cnn_forward.1} parent=0 // pred_fallthru
    _
  // Predicated region
  $region6: #{robust_filter_graph_cnn_forward.1} parent=0 // pred_check
    _
  $region7: #{robust_filter_graph_cnn_forward.1} parent=0 // pred_check_branch
    %26 = sbr.rel (0) target = $region9
  $region8: #{robust_filter_graph_cnn_forward.1} parent=0 // pred_region
    _
  $region9: #{robust_filter_graph_cnn_forward.1} parent=0 // pred_fallthru
    _
  // Predicated region
  $region10: #{robust_filter_graph_cnn_forward.1} parent=0 // pred_check
    _
  $region11: #{robust_filter_graph_cnn_forward.1} parent=0 // pred_check_branch
    %28 = sbr.rel (0) target = $region13
  $region12: #{robust_filter_graph_cnn_forward.1} parent=0 // pred_region
    _
  $region13: #{robust_filter_graph_cnn_forward.1} parent=0 // pred_fallthru
    _
  // Predicated region
  $region14: #{robust_filter_graph_cnn_forward.1} parent=0 // pred_check
    _
  $region15: #{robust_filter_graph_cnn_forward.1} parent=0 // pred_check_branch
    %30 = sbr.rel (0) target = $region17
  $region16: #{robust_filter_graph_cnn_forward.1} parent=0 // pred_region
    _
  $region17: #{robust_filter_graph_cnn_forward.1} parent=0 // pred_fallthru
    _
  // Predicated region
  $region18: #{robust_filter_graph_cnn_forward.1} parent=0 // pred_check
    _
  $region19: #{robust_filter_graph_cnn_forward.1} parent=0 // pred_check_branch
    %32 = sbr.rel (0) target = $region21
  $region20: #{robust_filter_graph_cnn_forward.1} parent=0 // pred_region
    _
  $region21: #{robust_filter_graph_cnn_forward.1} parent=0 // pred_fallthru
    _
  // Predicated region
  $region22: #{robust_filter_graph_cnn_forward.1} parent=0 // pred_check
    _
  $region23: #{robust_filter_graph_cnn_forward.1} parent=0 // pred_check_branch
    %34 = sbr.rel (0) target = $region25
  $region24: #{robust_filter_graph_cnn_forward.1} parent=0 // pred_region
    _
  $region25: #{robust_filter_graph_cnn_forward.1} parent=0 // pred_fallthru
    _
  // Predicated region
  $region26: #{robust_filter_graph_cnn_forward.1} parent=0 // pred_check
    _
  $region27: #{robust_filter_graph_cnn_forward.1} parent=0 // pred_check_branch
    %36 = sbr.rel (0) target = $region29
  $region28: #{robust_filter_graph_cnn_forward.1} parent=0 // pred_region
    _
  $region29: #{robust_filter_graph_cnn_forward.1} parent=0 // pred_fallthru
    _
  // Predicated region
  $region30: #{robust_filter_graph_cnn_forward.1} parent=0 // pred_check
    _
  $region31: #{robust_filter_graph_cnn_forward.1} parent=0 // pred_check_branch
    %38 = sbr.rel (0) target = $region33
  $region32: #{robust_filter_graph_cnn_forward.1} parent=0 // pred_region
    _
  $region33: #{robust_filter_graph_cnn_forward.1} parent=0 // pred_fallthru
    _
  // Predicated region
  $region34: #{robust_filter_graph_cnn_forward.1} parent=0 // pred_check
    _
  $region35: #{robust_filter_graph_cnn_forward.1} parent=0 // pred_check_branch
    %40 = sbr.rel (0) target = $region37
  $region36: #{robust_filter_graph_cnn_forward.1} parent=0 // pred_region
    _
  $region37: #{robust_filter_graph_cnn_forward.1} parent=0 // pred_fallthru
    _
  // Predicated region
  $region38: #{robust_filter_graph_cnn_forward.1} parent=0 // pred_check
    _
  $region39: #{robust_filter_graph_cnn_forward.1} parent=0 // pred_check_branch
    %42 = sbr.rel (0) target = $region41
  $region40: #{robust_filter_graph_cnn_forward.1} parent=0 // pred_region
    _
  $region41: #{robust_filter_graph_cnn_forward.1} parent=0 // pred_fallthru
    _
  // Predicated region
  $region42: #{robust_filter_graph_cnn_forward.1} parent=0 // pred_check
    _
  $region43: #{robust_filter_graph_cnn_forward.1} parent=0 // pred_check_branch
    %44 = sbr.rel (0) target = $region45
  $region44: #{robust_filter_graph_cnn_forward.1} parent=0 // pred_region
    _
  $region45: #{robust_filter_graph_cnn_forward.1} parent=0 // pred_fallthru
    _
  // Predicated region
  $region46: #{robust_filter_graph_cnn_forward.1} parent=0 // pred_check
    _
  $region47: #{robust_filter_graph_cnn_forward.1} parent=0 // pred_check_branch
    %46 = sbr.rel (0) target = $region49
  $region48: #{robust_filter_graph_cnn_forward.1} parent=0 // pred_region
    _
  $region49: #{robust_filter_graph_cnn_forward.1} parent=0 // pred_fallthru
    _
  // Predicated region
  $region50: #{robust_filter_graph_cnn_forward.1} parent=0 // pred_check
    _
  $region51: #{robust_filter_graph_cnn_forward.1} parent=0 // pred_check_branch
    %48 = sbr.rel (0) target = $region53
  $region52: #{robust_filter_graph_cnn_forward.1} parent=0 // pred_region
    _
  $region53: #{robust_filter_graph_cnn_forward.1} parent=0 // pred_fallthru
    _
  // Predicated region
  $region54: #{robust_filter_graph_cnn_forward.1} parent=0 // pred_check
    _
  $region55: #{robust_filter_graph_cnn_forward.1} parent=0 // pred_check_branch
    %50 = sbr.rel (0) target = $region57
  $region56: #{robust_filter_graph_cnn_forward.1} parent=0 // pred_region
    _
  $region57: #{robust_filter_graph_cnn_forward.1} parent=0 // pred_fallthru
    _
  // Predicated region
  $region58: #{robust_filter_graph_cnn_forward.1} parent=0 // pred_check
    _
  $region59: #{robust_filter_graph_cnn_forward.1} parent=0 // pred_check_branch
    %52 = sbr.rel (0) target = $region61
  $region60: #{robust_filter_graph_cnn_forward.1} parent=0 // pred_region
    _
  $region61: #{robust_filter_graph_cnn_forward.1} parent=0 // pred_fallthru
    _
  // Predicated region
  $region62: #{robust_filter_graph_cnn_forward.1} parent=0 // pred_check
    _
  $region63: #{robust_filter_graph_cnn_forward.1} parent=0 // pred_check_branch
    %54 = sbr.rel (0) target = $region65
  $region64: #{robust_filter_graph_cnn_forward.1} parent=0 // pred_region
    _
  $region65: #{robust_filter_graph_cnn_forward.1} parent=0 // pred_fallthru
    _
  // Predicated region
  $region66: #{robust_filter_graph_cnn_forward.1} parent=0 // pred_check
    _
  $region67: #{robust_filter_graph_cnn_forward.1} parent=0 // pred_check_branch
    %56 = sbr.rel (0) target = $region69
  $region68: #{robust_filter_graph_cnn_forward.1} parent=0 // pred_region
    _
  $region69: #{robust_filter_graph_cnn_forward.1} parent=0 // pred_fallthru
    _
  // Predicated region
  $region70: #{robust_filter_graph_cnn_forward.1} parent=0 // pred_check
    _
  $region71: #{robust_filter_graph_cnn_forward.1} parent=0 // pred_check_branch
    %58 = sbr.rel (0) target = $region73
  $region72: #{robust_filter_graph_cnn_forward.1} parent=0 // pred_region
    _
  $region73: #{robust_filter_graph_cnn_forward.1} parent=0 // pred_fallthru
    _
  %v60 = vld [vmem:[%s0] sm:$0xf]
  %v61 = vld [vmem:[%s0 + $0x4] sm:$0xf]
  %v62 = vld [vmem:[%s1] sm:$0xf]
  %v63 = vld [vmem:[%s1 + $0x4] sm:$0xf]
  %v64 = vld [vmem:[%s1 + $0x8] sm:$0xf]
  %v65 = vld [vmem:[%s1 + $0xc] sm:$0xf]
  %v66 = vld [vmem:[%s1 + $0x10] sm:$0xf]
  %v67 = vld [vmem:[%s1 + $0x14] sm:$0xf]
  %v68 = vld [vmem:[%s2] sm:$0xf]
  %v69 = vld [vmem:[%s2 + $0x4] sm:$0xf]
  %v70 = vld [vmem:[%s3] sm:$0x1]
  %v72 = vlaneseq
  %v73 = vshrl.u32 %v72, 7
  %v74 = vsub.s32 0, %v73
  %v75 = vrot.slane %v70, %v74
  %v79 = vunpack.c.l.b16 %v60
  %v80 = vunpack.c.l.b16 %v61
  %v81 = vpack.c.b16 %v80, %v79
  %v84 = vunpack.c.l.b16 %v68
  %v85 = vunpack.c.l.b16 %v69
  %v86 = vpack.c.b16 %v85, %v84
  %vm88 = vcmask 130048
  %v90 = vsel %vm88, %v81, 0
  %92 = vmatprep.subr.bf16.mxu0 0
  %93 = vmatpush1.bf16.msra.mxu0 %v86
  %94 = vmatprep.subr.bf16.mxu0 0
  %95 = vmatpush1.bf16.msra.mxu0 0
  %96 = vmatprep.subr.bf16.mxu0 0
  %97 = vmatpush1.bf16.msra.mxu0 0
  %98 = vmatprep.subr.bf16.mxu0 0
  %99 = vmatpush1.bf16.msra.mxu0 0
  %100 = vmatprep.subr.bf16.mxu0 0
  %101 = vmatpush1.bf16.msra.mxu0 0
  %102 = vmatprep.subr.bf16.mxu0 0
  %103 = vmatpush1.bf16.msra.mxu0 0
  %104 = vmatprep.subr.bf16.mxu0 0
  %105 = vmatpush1.bf16.msra.mxu0 0
  %106 = vmatprep.subr.bf16.mxu0 0
  %107 = vmatpush1.bf16.msra.mxu0 0
  %108 = vmatprep.subr.bf16.mxu0 0
  %109 = vmatpush1.bf16.msra.mxu0 0
  %110 = vmatprep.subr.bf16.mxu0 0
  %111 = vmatpush1.bf16.msra.mxu0 0
  %112 = vmatprep.subr.bf16.mxu0 0
  %113 = vmatpush1.bf16.msra.mxu0 0
  %114 = vmatprep.subr.bf16.mxu0 0
  %115 = vmatpush1.bf16.msra.mxu0 0
  %116 = vmatprep.subr.bf16.mxu0 0
  %117 = vmatpush1.bf16.msra.mxu0 0
  %118 = vmatprep.subr.bf16.mxu0 0
  %119 = vmatpush1.bf16.msra.mxu0 0
  %120 = vmatprep.subr.bf16.mxu0 0
  %121 = vmatpush1.bf16.msra.mxu0 0
  %122 = vmatprep.subr.bf16.mxu0 0
  %123 = vmatpush1.bf16.msra.mxu0 0
  %124 = vmatprep.mubr.bf16.mxu0 0
  %125 = vmatmul.mubr.bf16.gmra.mrb[0].mxu0 %v90
  %v126 = vpop.f32.mrb[0].mxu0
  %v127 = vadd.f32 %v75, %v126
  %v128 = vpop.f32.mrb[0].mxu0
  %v129 = vpop.f32.mrb[0].mxu0
  %v130 = vadd.f32 %v75, %v129
  %v131 = vpop.f32.mrb[0].mxu0
  %132 = vdwg.mxu0
  %v133 = vmax.f32 %v127, 0.0
  %v134 = vmax.f32 %v130, 0.0
  %v135 = vpack.c.bf16 %v134, %v133
  %v142 = vunpack.c.l.b16 %v62
  %v143 = vunpack.c.l.b16 %v63
  %v144 = vunpack.c.l.b16 %v64
  %v145 = vunpack.c.l.b16 %v65
  %v146 = vunpack.c.l.b16 %v66
  %v147 = vunpack.c.l.b16 %v67
  %v148 = vpack.c.b16 %v143, %v142
  %v149 = vpack.c.b16 %v145, %v144
  %v150 = vpack.c.b16 %v147, %v146
  %v152 = vsel %vm88, %v148, 0
  %v155 = vsel %vm88, %v149, 0
  %v158 = vsel %vm88, %v150, 0
  %160 = vmatprep.subr.bf16.mxu0 0
  %161 = vmatpush1.bf16.msra.mxu0 %v135
  %162 = vmatprep.subr.bf16.mxu0 0
  %163 = vmatpush1.bf16.msra.mxu0 0
  %164 = vmatprep.subr.bf16.mxu0 0
  %165 = vmatpush1.bf16.msra.mxu0 0
  %166 = vmatprep.subr.bf16.mxu0 0
  %167 = vmatpush1.bf16.msra.mxu0 0
  %168 = vmatprep.subr.bf16.mxu0 0
  %169 = vmatpush1.bf16.msra.mxu0 0
  %170 = vmatprep.subr.bf16.mxu0 0
  %171 = vmatpush1.bf16.msra.mxu0 0
  %172 = vmatprep.subr.bf16.mxu0 0
  %173 = vmatpush1.bf16.msra.mxu0 0
  %174 = vmatprep.subr.bf16.mxu0 0
  %175 = vmatpush1.bf16.msra.mxu0 0
  %176 = vmatprep.subr.bf16.mxu0 0
  %177 = vmatpush1.bf16.msra.mxu0 0
  %178 = vmatprep.subr.bf16.mxu0 0
  %179 = vmatpush1.bf16.msra.mxu0 0
  %180 = vmatprep.subr.bf16.mxu0 0
  %181 = vmatpush1.bf16.msra.mxu0 0
  %182 = vmatprep.subr.bf16.mxu0 0
  %183 = vmatpush1.bf16.msra.mxu0 0
  %184 = vmatprep.subr.bf16.mxu0 0
  %185 = vmatpush1.bf16.msra.mxu0 0
  %186 = vmatprep.subr.bf16.mxu0 0
  %187 = vmatpush1.bf16.msra.mxu0 0
  %188 = vmatprep.subr.bf16.mxu0 0
  %189 = vmatpush1.bf16.msra.mxu0 0
  %190 = vmatprep.subr.bf16.mxu0 0
  %191 = vmatpush1.bf16.msra.mxu0 0
  %192 = vmatprep.mubr.bf16.mxu0 0
  %193 = vmatmul.mubr.bf16.gmra.mrb[0].mxu0 %v152
  %v194 = vpop.f32.mrb[0].mxu0
  %v195 = vadd.f32 0.0, %v194
  %v196 = vpop.f32.mrb[0].mxu0
  %v197 = vpop.f32.mrb[0].mxu0
  %v198 = vadd.f32 0.0, %v197
  %v199 = vpop.f32.mrb[0].mxu0
  %200 = vmatprep.mubr.bf16.mxu0 0
  %201 = vmatmul.mubr.bf16.gmra.mrb[0].mxu0 %v155
  %v202 = vpop.f32.mrb[0].mxu0
  %v203 = vadd.f32 0.0, %v202
  %v204 = vpop.f32.mrb[0].mxu0
  %v205 = vpop.f32.mrb[0].mxu0
  %v206 = vadd.f32 0.0, %v205
  %v207 = vpop.f32.mrb[0].mxu0
  %208 = vmatprep.mubr.bf16.mxu0 0
  %209 = vmatmul.mubr.bf16.gmra.mrb[0].mxu0 %v158
  %v210 = vpop.f32.mrb[0].mxu0
  %v211 = vadd.f32 0.0, %v210
  %v212 = vpop.f32.mrb[0].mxu0
  %v213 = vpop.f32.mrb[0].mxu0
  %v214 = vadd.f32 0.0, %v213
  %v215 = vpop.f32.mrb[0].mxu0
  %216 = vdwg.mxu0
  %v217 = vpack.c.bf16 %v198, %v195
  %v218 = vpack.c.bf16 %v206, %v203
  %v219 = vpack.c.bf16 %v214, %v211
  %221 = vrot.lane.b32.xlu0 %v217, 32
  %v222 = vpop.permute.xlu0 %221
  %224 = vrot.lane.b32.xlu0 %v218, 64
  %v225 = vpop.permute.xlu0 %224
  %227 = vrot.lane.b32.xlu0 %v219, 96
  %v228 = vpop.permute.xlu0 %227
  %vm229 = vcmask 261120
  %v232 = vsel %vm229, %v135, %v222
  %vm233 = vcmask 523264
  %v235 = vsel %vm233, %v232, %v225
  %vm236 = vcmask 785408
  %v238 = vsel %vm236, %v235, %v228
  %v240 = vld [vmem:[%s4] sm:$0xf]
  %v241 = vld [vmem:[%s4 + $0x4] sm:$0xf]
  %v242 = vld [vmem:[%s4 + $0x8] sm:$0xf]
  %v243 = vld [vmem:[%s4 + $0xc] sm:$0xf]
  %v244 = vld [vmem:[%s4 + $0x10] sm:$0xf]
  %v245 = vld [vmem:[%s4 + $0x14] sm:$0xf]
  %v246 = vld [vmem:[%s4 + $0x18] sm:$0xf]
  %v247 = vld [vmem:[%s4 + $0x1c] sm:$0xf]
  %v248 = vld [vmem:[%s4 + $0x20] sm:$0xf]
  %v249 = vld [vmem:[%s4 + $0x24] sm:$0xf]
  %v250 = vld [vmem:[%s4 + $0x28] sm:$0xf]
  %v251 = vld [vmem:[%s4 + $0x2c] sm:$0xf]
  %v252 = vld [vmem:[%s4 + $0x30] sm:$0xf]
  %v253 = vld [vmem:[%s4 + $0x34] sm:$0xf]
  %v254 = vld [vmem:[%s4 + $0x38] sm:$0xf]
  %v255 = vld [vmem:[%s4 + $0x3c] sm:$0xf]
  %v256 = vld [vmem:[%s5] sm:$0x1]
  %v258 = vlaneseq
  %v259 = vshrl.u32 %v258, 7
  %v260 = vsub.s32 0, %v259
  %v261 = vrot.slane %v256, %v260
  %v279 = vunpack.c.l.b16 %v240
  %v280 = vunpack.c.l.b16 %v241
  %v281 = vunpack.c.l.b16 %v242
  %v282 = vunpack.c.l.b16 %v243
  %v283 = vunpack.c.l.b16 %v244
  %v284 = vunpack.c.l.b16 %v245
  %v285 = vunpack.c.l.b16 %v246
  %v286 = vunpack.c.l.b16 %v247
  %v287 = vunpack.c.l.b16 %v248
  %v288 = vunpack.c.l.b16 %v249
  %v289 = vunpack.c.l.b16 %v250
  %v290 = vunpack.c.l.b16 %v251
  %v291 = vunpack.c.l.b16 %v252
  %v292 = vunpack.c.l.b16 %v253
  %v293 = vunpack.c.l.b16 %v254
  %v294 = vunpack.c.l.b16 %v255
  %v295 = vpack.c.b16 %v280, %v279
  %v296 = vpack.c.b16 %v282, %v281
  %v297 = vpack.c.b16 %v284, %v283
  %v298 = vpack.c.b16 %v286, %v285
  %v299 = vpack.c.b16 %v288, %v287
  %v300 = vpack.c.b16 %v290, %v289
  %v301 = vpack.c.b16 %v292, %v291
  %v302 = vpack.c.b16 %v294, %v293
  %311 = vmatprep.subr.bf16.mxu0 0
  %312 = vmatpush1.bf16.msra.mxu0 %v295
  %313 = vmatprep.subr.bf16.mxu0 0
  %314 = vmatpush1.bf16.msra.mxu0 %v296
  %315 = vmatprep.subr.bf16.mxu0 0
  %316 = vmatpush1.bf16.msra.mxu0 %v297
  %317 = vmatprep.subr.bf16.mxu0 0
  %318 = vmatpush1.bf16.msra.mxu0 %v298
  %319 = vmatprep.subr.bf16.mxu0 0
  %320 = vmatpush1.bf16.msra.mxu0 %v299
  %321 = vmatprep.subr.bf16.mxu0 0
  %322 = vmatpush1.bf16.msra.mxu0 %v300
  %323 = vmatprep.subr.bf16.mxu0 0
  %324 = vmatpush1.bf16.msra.mxu0 %v301
  %325 = vmatprep.subr.bf16.mxu0 0
  %326 = vmatpush1.bf16.msra.mxu0 %v302
  %327 = vmatprep.subr.bf16.mxu0 0
  %328 = vmatpush1.bf16.msra.mxu0 0
  %329 = vmatprep.subr.bf16.mxu0 0
  %330 = vmatpush1.bf16.msra.mxu0 0
  %331 = vmatprep.subr.bf16.mxu0 0
  %332 = vmatpush1.bf16.msra.mxu0 0
  %333 = vmatprep.subr.bf16.mxu0 0
  %334 = vmatpush1.bf16.msra.mxu0 0
  %335 = vmatprep.subr.bf16.mxu0 0
  %336 = vmatpush1.bf16.msra.mxu0 0
  %337 = vmatprep.subr.bf16.mxu0 0
  %338 = vmatpush1.bf16.msra.mxu0 0
  %339 = vmatprep.subr.bf16.mxu0 0
  %340 = vmatpush1.bf16.msra.mxu0 0
  %341 = vmatprep.subr.bf16.mxu0 0
  %342 = vmatpush1.bf16.msra.mxu0 0
  %343 = vmatprep.mubr.bf16.mxu0 0
  %344 = vmatmul.mubr.bf16.gmra.mrb[0].mxu0 %v238
  %v345 = vpop.f32.mrb[0].mxu0
  %v346 = vadd.f32 %v261, %v345
  %v347 = vpop.f32.mrb[0].mxu0
  %v348 = vpop.f32.mrb[0].mxu0
  %v349 = vadd.f32 %v261, %v348
  %v350 = vpop.f32.mrb[0].mxu0
  %351 = vdwg.mxu0
  %v352 = vmax.f32 %v346, 0.0
  %v353 = vmax.f32 %v349, 0.0
  %v354 = vpack.c.bf16 %v353, %v352
  %355 = vmatprep.subr.bf16.mxu0 0
  %356 = vmatpush1.bf16.msra.mxu0 %v354
  %357 = vmatprep.subr.bf16.mxu0 0
  %358 = vmatpush1.bf16.msra.mxu0 0
  %359 = vmatprep.subr.bf16.mxu0 0
  %360 = vmatpush1.bf16.msra.mxu0 0
  %361 = vmatprep.subr.bf16.mxu0 0
  %362 = vmatpush1.bf16.msra.mxu0 0
  %363 = vmatprep.subr.bf16.mxu0 0
  %364 = vmatpush1.bf16.msra.mxu0 0
  %365 = vmatprep.subr.bf16.mxu0 0
  %366 = vmatpush1.bf16.msra.mxu0 0
  %367 = vmatprep.subr.bf16.mxu0 0
  %368 = vmatpush1.bf16.msra.mxu0 0
  %369 = vmatprep.subr.bf16.mxu0 0
  %370 = vmatpush1.bf16.msra.mxu0 0
  %371 = vmatprep.subr.bf16.mxu0 0
  %372 = vmatpush1.bf16.msra.mxu0 0
  %373 = vmatprep.subr.bf16.mxu0 0
  %374 = vmatpush1.bf16.msra.mxu0 0
  %375 = vmatprep.subr.bf16.mxu0 0
  %376 = vmatpush1.bf16.msra.mxu0 0
  %377 = vmatprep.subr.bf16.mxu0 0
  %378 = vmatpush1.bf16.msra.mxu0 0
  %379 = vmatprep.subr.bf16.mxu0 0
  %380 = vmatpush1.bf16.msra.mxu0 0
  %381 = vmatprep.subr.bf16.mxu0 0
  %382 = vmatpush1.bf16.msra.mxu0 0
  %383 = vmatprep.subr.bf16.mxu0 0
  %384 = vmatpush1.bf16.msra.mxu0 0
  %385 = vmatprep.subr.bf16.mxu0 0
  %386 = vmatpush1.bf16.msra.mxu0 0
  %387 = vmatprep.mubr.bf16.mxu0 0
  %388 = vmatmul.mubr.bf16.gmra.mrb[0].mxu0 %v152
  %v389 = vpop.f32.mrb[0].mxu0
  %v390 = vadd.f32 0.0, %v389
  %v391 = vpop.f32.mrb[0].mxu0
  %v392 = vpop.f32.mrb[0].mxu0
  %v393 = vadd.f32 0.0, %v392
  %v394 = vpop.f32.mrb[0].mxu0
  %395 = vmatprep.mubr.bf16.mxu0 0
  %396 = vmatmul.mubr.bf16.gmra.mrb[0].mxu0 %v155
  %v397 = vpop.f32.mrb[0].mxu0
  %v398 = vadd.f32 0.0, %v397
  %v399 = vpop.f32.mrb[0].mxu0
  %v400 = vpop.f32.mrb[0].mxu0
  %v401 = vadd.f32 0.0, %v400
  %v402 = vpop.f32.mrb[0].mxu0
  %403 = vmatprep.mubr.bf16.mxu0 0
  %404 = vmatmul.mubr.bf16.gmra.mrb[0].mxu0 %v158
  %v405 = vpop.f32.mrb[0].mxu0
  %v406 = vadd.f32 0.0, %v405
  %v407 = vpop.f32.mrb[0].mxu0
  %v408 = vpop.f32.mrb[0].mxu0
  %v409 = vadd.f32 0.0, %v408
  %v410 = vpop.f32.mrb[0].mxu0
  %411 = vdwg.mxu0
  %v412 = vpack.c.bf16 %v393, %v390
  %v413 = vpack.c.bf16 %v401, %v398
  %v414 = vpack.c.bf16 %v409, %v406
  %416 = vrot.lane.b32.xlu0 %v412, 32
  %v417 = vpop.permute.xlu0 %416
  %419 = vrot.lane.b32.xlu0 %v413, 64
  %v420 = vpop.permute.xlu0 %419
  %422 = vrot.lane.b32.xlu0 %v414, 96
  %v423 = vpop.permute.xlu0 %422
  %v426 = vsel %vm229, %v354, %v417
  %v428 = vsel %vm233, %v426, %v420
  %v430 = vsel %vm236, %v428, %v423
  %v432 = vld [vmem:[%s6] sm:$0xf]
  %v433 = vld [vmem:[%s6 + $0x4] sm:$0xf]
  %v434 = vld [vmem:[%s6 + $0x8] sm:$0xf]
  %v435 = vld [vmem:[%s6 + $0xc] sm:$0xf]
  %v436 = vld [vmem:[%s6 + $0x10] sm:$0xf]
  %v437 = vld [vmem:[%s6 + $0x14] sm:$0xf]
  %v438 = vld [vmem:[%s6 + $0x18] sm:$0xf]
  %v439 = vld [vmem:[%s6 + $0x1c] sm:$0xf]
  %v440 = vld [vmem:[%s6 + $0x20] sm:$0xf]
  %v441 = vld [vmem:[%s6 + $0x24] sm:$0xf]
  %v442 = vld [vmem:[%s6 + $0x28] sm:$0xf]
  %v443 = vld [vmem:[%s6 + $0x2c] sm:$0xf]
  %v444 = vld [vmem:[%s6 + $0x30] sm:$0xf]
  %v445 = vld [vmem:[%s6 + $0x34] sm:$0xf]
  %v446 = vld [vmem:[%s6 + $0x38] sm:$0xf]
  %v447 = vld [vmem:[%s6 + $0x3c] sm:$0xf]
  %v448 = vld [vmem:[%s7] sm:$0x1]
  %v450 = vlaneseq
  %v451 = vshrl.u32 %v450, 7
  %v452 = vsub.s32 0, %v451
  %v453 = vrot.slane %v448, %v452
  %v471 = vunpack.c.l.b16 %v432
  %v472 = vunpack.c.l.b16 %v433
  %v473 = vunpack.c.l.b16 %v434
  %v474 = vunpack.c.l.b16 %v435
  %v475 = vunpack.c.l.b16 %v436
  %v476 = vunpack.c.l.b16 %v437
  %v477 = vunpack.c.l.b16 %v438
  %v478 = vunpack.c.l.b16 %v439
  %v479 = vunpack.c.l.b16 %v440
  %v480 = vunpack.c.l.b16 %v441
  %v481 = vunpack.c.l.b16 %v442
  %v482 = vunpack.c.l.b16 %v443
  %v483 = vunpack.c.l.b16 %v444
  %v484 = vunpack.c.l.b16 %v445
  %v485 = vunpack.c.l.b16 %v446
  %v486 = vunpack.c.l.b16 %v447
  %v487 = vpack.c.b16 %v472, %v471
  %v488 = vpack.c.b16 %v474, %v473
  %v489 = vpack.c.b16 %v476, %v475
  %v490 = vpack.c.b16 %v478, %v477
  %v491 = vpack.c.b16 %v480, %v479
  %v492 = vpack.c.b16 %v482, %v481
  %v493 = vpack.c.b16 %v484, %v483
  %v494 = vpack.c.b16 %v486, %v485
  %503 = vmatprep.subr.bf16.mxu0 0
  %504 = vmatpush1.bf16.msra.mxu0 %v487
  %505 = vmatprep.subr.bf16.mxu0 0
  %506 = vmatpush1.bf16.msra.mxu0 %v488
  %507 = vmatprep.subr.bf16.mxu0 0
  %508 = vmatpush1.bf16.msra.mxu0 %v489
  %509 = vmatprep.subr.bf16.mxu0 0
  %510 = vmatpush1.bf16.msra.mxu0 %v490
  %511 = vmatprep.subr.bf16.mxu0 0
  %512 = vmatpush1.bf16.msra.mxu0 %v491
  %513 = vmatprep.subr.bf16.mxu0 0
  %514 = vmatpush1.bf16.msra.mxu0 %v492
  %515 = vmatprep.subr.bf16.mxu0 0
  %516 = vmatpush1.bf16.msra.mxu0 %v493
  %517 = vmatprep.subr.bf16.mxu0 0
  %518 = vmatpush1.bf16.msra.mxu0 %v494
  %519 = vmatprep.subr.bf16.mxu0 0
  %520 = vmatpush1.bf16.msra.mxu0 0
  %521 = vmatprep.subr.bf16.mxu0 0
  %522 = vmatpush1.bf16.msra.mxu0 0
  %523 = vmatprep.subr.bf16.mxu0 0
  %524 = vmatpush1.bf16.msra.mxu0 0
  %525 = vmatprep.subr.bf16.mxu0 0
  %526 = vmatpush1.bf16.msra.mxu0 0
  %527 = vmatprep.subr.bf16.mxu0 0
  %528 = vmatpush1.bf16.msra.mxu0 0
  %529 = vmatprep.subr.bf16.mxu0 0
  %530 = vmatpush1.bf16.msra.mxu0 0
  %531 = vmatprep.subr.bf16.mxu0 0
  %532 = vmatpush1.bf16.msra.mxu0 0
  %533 = vmatprep.subr.bf16.mxu0 0
  %534 = vmatpush1.bf16.msra.mxu0 0
  %535 = vmatprep.mubr.bf16.mxu0 0
  %536 = vmatmul.mubr.bf16.gmra.mrb[0].mxu0 %v430
  %v537 = vpop.f32.mrb[0].mxu0
  %v538 = vadd.f32 %v453, %v537
  %v539 = vpop.f32.mrb[0].mxu0
  %v540 = vpop.f32.mrb[0].mxu0
  %v541 = vadd.f32 %v453, %v540
  %v542 = vpop.f32.mrb[0].mxu0
  %543 = vdwg.mxu0
  %v544 = vmax.f32 %v538, 0.0
  %v545 = vmax.f32 %v541, 0.0
  %v546 = vpack.c.bf16 %v545, %v544
  %547 = vmatprep.subr.bf16.mxu0 0
  %548 = vmatpush1.bf16.msra.mxu0 %v546
  %549 = vmatprep.subr.bf16.mxu0 0
  %550 = vmatpush1.bf16.msra.mxu0 0
  %551 = vmatprep.subr.bf16.mxu0 0
  %552 = vmatpush1.bf16.msra.mxu0 0
  %553 = vmatprep.subr.bf16.mxu0 0
  %554 = vmatpush1.bf16.msra.mxu0 0
  %555 = vmatprep.subr.bf16.mxu0 0
  %556 = vmatpush1.bf16.msra.mxu0 0
  %557 = vmatprep.subr.bf16.mxu0 0
  %558 = vmatpush1.bf16.msra.mxu0 0
  %559 = vmatprep.subr.bf16.mxu0 0
  %560 = vmatpush1.bf16.msra.mxu0 0
  %561 = vmatprep.subr.bf16.mxu0 0
  %562 = vmatpush1.bf16.msra.mxu0 0
  %563 = vmatprep.subr.bf16.mxu0 0
  %564 = vmatpush1.bf16.msra.mxu0 0
  %565 = vmatprep.subr.bf16.mxu0 0
  %566 = vmatpush1.bf16.msra.mxu0 0
  %567 = vmatprep.subr.bf16.mxu0 0
  %568 = vmatpush1.bf16.msra.mxu0 0
  %569 = vmatprep.subr.bf16.mxu0 0
  %570 = vmatpush1.bf16.msra.mxu0 0
  %571 = vmatprep.subr.bf16.mxu0 0
  %572 = vmatpush1.bf16.msra.mxu0 0
  %573 = vmatprep.subr.bf16.mxu0 0
  %574 = vmatpush1.bf16.msra.mxu0 0
  %575 = vmatprep.subr.bf16.mxu0 0
  %576 = vmatpush1.bf16.msra.mxu0 0
  %577 = vmatprep.subr.bf16.mxu0 0
  %578 = vmatpush1.bf16.msra.mxu0 0
  %579 = vmatprep.mubr.bf16.mxu0 0
  %580 = vmatmul.mubr.bf16.gmra.mrb[0].mxu0 %v152
  %v581 = vpop.f32.mrb[0].mxu0
  %v582 = vadd.f32 0.0, %v581
  %v583 = vpop.f32.mrb[0].mxu0
  %v584 = vpop.f32.mrb[0].mxu0
  %v585 = vadd.f32 0.0, %v584
  %v586 = vpop.f32.mrb[0].mxu0
  %587 = vmatprep.mubr.bf16.mxu0 0
  %588 = vmatmul.mubr.bf16.gmra.mrb[0].mxu0 %v155
  %v589 = vpop.f32.mrb[0].mxu0
  %v590 = vadd.f32 0.0, %v589
  %v591 = vpop.f32.mrb[0].mxu0
  %v592 = vpop.f32.mrb[0].mxu0
  %v593 = vadd.f32 0.0, %v592
  %v594 = vpop.f32.mrb[0].mxu0
  %595 = vmatprep.mubr.bf16.mxu0 0
  %596 = vmatmul.mubr.bf16.gmra.mrb[0].mxu0 %v158
  %v597 = vpop.f32.mrb[0].mxu0
  %v598 = vadd.f32 0.0, %v597
  %v599 = vpop.f32.mrb[0].mxu0
  %v600 = vpop.f32.mrb[0].mxu0
  %v601 = vadd.f32 0.0, %v600
  %v602 = vpop.f32.mrb[0].mxu0
  %603 = vdwg.mxu0
  %v604 = vpack.c.bf16 %v585, %v582
  %v605 = vpack.c.bf16 %v593, %v590
  %v606 = vpack.c.bf16 %v601, %v598
  %608 = vrot.lane.b32.xlu0 %v354, 32
  %v609 = vpop.permute.xlu0 %608
  %v612 = vsel %vm229, %v546, %v609
  %613 = vrot.lane.b32.xlu0 %v413, 32
  %v614 = vpop.permute.xlu0 %613
  %615 = vrot.lane.b32.xlu0 %v414, 32
  %v616 = vpop.permute.xlu0 %615
  %v618 = vsel %vm229, %v604, %v417
  %v621 = vsel %vm229, %v605, %v614
  %v624 = vsel %vm229, %v606, %v616
  %626 = vrot.lane.b32.xlu0 %v618, 64
  %v627 = vpop.permute.xlu0 %626
  %629 = vrot.lane.b32.xlu0 %v624, 64
  %v630 = vpop.permute.xlu0 %629
  %v632 = vsel %vm233, %v612, %v627
  %v635 = vsel %vm233, %v621, %v630
  %v637 = vld [vmem:[%s8] sm:$0xf]
  %v638 = vld [vmem:[%s8 + $0x4] sm:$0xf]
  %v639 = vld [vmem:[%s8 + $0x8] sm:$0xf]
  %v640 = vld [vmem:[%s8 + $0xc] sm:$0xf]
  %v641 = vld [vmem:[%s8 + $0x10] sm:$0xf]
  %v642 = vld [vmem:[%s8 + $0x14] sm:$0xf]
  %v643 = vld [vmem:[%s8 + $0x18] sm:$0xf]
  %v644 = vld [vmem:[%s8 + $0x1c] sm:$0xf]
  %v645 = vld [vmem:[%s8 + $0x20] sm:$0xf]
  %v646 = vld [vmem:[%s8 + $0x24] sm:$0xf]
  %v647 = vld [vmem:[%s8 + $0x28] sm:$0xf]
  %v648 = vld [vmem:[%s8 + $0x2c] sm:$0xf]
  %v649 = vld [vmem:[%s8 + $0x30] sm:$0xf]
  %v650 = vld [vmem:[%s8 + $0x34] sm:$0xf]
  %v651 = vld [vmem:[%s8 + $0x38] sm:$0xf]
  %v652 = vld [vmem:[%s8 + $0x3c] sm:$0xf]
  %v653 = vld [vmem:[%s8 + $0x40] sm:$0xf]
  %v654 = vld [vmem:[%s8 + $0x44] sm:$0xf]
  %v655 = vld [vmem:[%s8 + $0x48] sm:$0xf]
  %v656 = vld [vmem:[%s8 + $0x4c] sm:$0xf]
  %v657 = vld [vmem:[%s8 + $0x50] sm:$0xf]
  %v658 = vld [vmem:[%s8 + $0x54] sm:$0xf]
  %v659 = vld [vmem:[%s8 + $0x58] sm:$0xf]
  %v660 = vld [vmem:[%s8 + $0x5c] sm:$0xf]
  %v661 = vld [vmem:[%s8 + $0x60] sm:$0xf]
  %v662 = vld [vmem:[%s8 + $0x64] sm:$0xf]
  %v663 = vld [vmem:[%s8 + $0x68] sm:$0xf]
  %v664 = vld [vmem:[%s8 + $0x6c] sm:$0xf]
  %v665 = vld [vmem:[%s8 + $0x70] sm:$0xf]
  %v666 = vld [vmem:[%s8 + $0x74] sm:$0xf]
  %v667 = vld [vmem:[%s8 + $0x78] sm:$0xf]
  %v668 = vld [vmem:[%s8 + $0x7c] sm:$0xf]
  %v669 = vld [vmem:[%s9] sm:$0x1]
  %v671 = vlaneseq
  %v672 = vshrl.u32 %v671, 7
  %v673 = vsub.s32 0, %v672
  %v674 = vrot.slane %v669, %v673
  %v708 = vunpack.c.l.b16 %v637
  %v709 = vunpack.c.l.b16 %v638
  %v710 = vunpack.c.l.b16 %v639
  %v711 = vunpack.c.l.b16 %v640
  %v712 = vunpack.c.l.b16 %v641
  %v713 = vunpack.c.l.b16 %v642
  %v714 = vunpack.c.l.b16 %v643
  %v715 = vunpack.c.l.b16 %v644
  %v716 = vunpack.c.l.b16 %v645
  %v717 = vunpack.c.l.b16 %v646
  %v718 = vunpack.c.l.b16 %v647
  %v719 = vunpack.c.l.b16 %v648
  %v720 = vunpack.c.l.b16 %v649
  %v721 = vunpack.c.l.b16 %v650
  %v722 = vunpack.c.l.b16 %v651
  %v723 = vunpack.c.l.b16 %v652
  %v724 = vunpack.c.l.b16 %v653
  %v725 = vunpack.c.l.b16 %v654
  %v726 = vunpack.c.l.b16 %v655
  %v727 = vunpack.c.l.b16 %v656
  %v728 = vunpack.c.l.b16 %v657
  %v729 = vunpack.c.l.b16 %v658
  %v730 = vunpack.c.l.b16 %v659
  %v731 = vunpack.c.l.b16 %v660
  %v732 = vunpack.c.l.b16 %v661
  %v733 = vunpack.c.l.b16 %v662
  %v734 = vunpack.c.l.b16 %v663
  %v735 = vunpack.c.l.b16 %v664
  %v736 = vunpack.c.l.b16 %v665
  %v737 = vunpack.c.l.b16 %v666
  %v738 = vunpack.c.l.b16 %v667
  %v739 = vunpack.c.l.b16 %v668
  %v740 = vpack.c.b16 %v709, %v708
  %v741 = vpack.c.b16 %v711, %v710
  %v742 = vpack.c.b16 %v713, %v712
  %v743 = vpack.c.b16 %v715, %v714
  %v744 = vpack.c.b16 %v717, %v716
  %v745 = vpack.c.b16 %v719, %v718
  %v746 = vpack.c.b16 %v721, %v720
  %v747 = vpack.c.b16 %v723, %v722
  %v748 = vpack.c.b16 %v725, %v724
  %v749 = vpack.c.b16 %v727, %v726
  %v750 = vpack.c.b16 %v729, %v728
  %v751 = vpack.c.b16 %v731, %v730
  %v752 = vpack.c.b16 %v733, %v732
  %v753 = vpack.c.b16 %v735, %v734
  %v754 = vpack.c.b16 %v737, %v736
  %v755 = vpack.c.b16 %v739, %v738
  %772 = vmatprep.subr.bf16.mxu0 0
  %773 = vmatpush1.bf16.msra.mxu0 %v740
  %774 = vmatprep.subr.bf16.mxu0 0
  %775 = vmatpush1.bf16.msra.mxu0 %v741
  %776 = vmatprep.subr.bf16.mxu0 0
  %777 = vmatpush1.bf16.msra.mxu0 %v742
  %778 = vmatprep.subr.bf16.mxu0 0
  %779 = vmatpush1.bf16.msra.mxu0 %v743
  %780 = vmatprep.subr.bf16.mxu0 0
  %781 = vmatpush1.bf16.msra.mxu0 %v744
  %782 = vmatprep.subr.bf16.mxu0 0
  %783 = vmatpush1.bf16.msra.mxu0 %v745
  %784 = vmatprep.subr.bf16.mxu0 0
  %785 = vmatpush1.bf16.msra.mxu0 %v746
  %786 = vmatprep.subr.bf16.mxu0 0
  %787 = vmatpush1.bf16.msra.mxu0 %v747
  %788 = vmatprep.subr.bf16.mxu0 0
  %789 = vmatpush1.bf16.msra.mxu0 %v748
  %790 = vmatprep.subr.bf16.mxu0 0
  %791 = vmatpush1.bf16.msra.mxu0 %v749
  %792 = vmatprep.subr.bf16.mxu0 0
  %793 = vmatpush1.bf16.msra.mxu0 %v750
  %794 = vmatprep.subr.bf16.mxu0 0
  %795 = vmatpush1.bf16.msra.mxu0 %v751
  %796 = vmatprep.subr.bf16.mxu0 0
  %797 = vmatpush1.bf16.msra.mxu0 %v752
  %798 = vmatprep.subr.bf16.mxu0 0
  %799 = vmatpush1.bf16.msra.mxu0 %v753
  %800 = vmatprep.subr.bf16.mxu0 0
  %801 = vmatpush1.bf16.msra.mxu0 %v754
  %802 = vmatprep.subr.bf16.mxu0 0
  %803 = vmatpush1.bf16.msra.mxu0 %v755
  %804 = vmatprep.mubr.bf16.mxu0 %v635
  %805 = vmatmul.mubr.bf16.gmra.mrb[0].mxu0 %v632
  %v806 = vpop.f32.mrb[0].mxu0
  %v807 = vadd.f32 %v674, %v806
  %v808 = vpop.f32.mrb[0].mxu0
  %v809 = vpop.f32.mrb[0].mxu0
  %v810 = vadd.f32 %v674, %v809
  %v811 = vpop.f32.mrb[0].mxu0
  %812 = vdwg.mxu0
  %v813 = vmax.f32 %v807, 0.0
  %v814 = vmax.f32 %v810, 0.0
  %v815 = vpack.c.bf16 %v814, %v813
  %v817 = vsel %vm229, %v815, %v609
  %v818 = vld [vmem:[%s10] sm:$0xf]
  %v819 = vld [vmem:[%s10 + $0x4] sm:$0xf]
  %v820 = vld [vmem:[%s10 + $0x8] sm:$0xf]
  %v821 = vld [vmem:[%s10 + $0xc] sm:$0xf]
  %v822 = vld [vmem:[%s10 + $0x10] sm:$0xf]
  %v823 = vld [vmem:[%s10 + $0x14] sm:$0xf]
  %v824 = vld [vmem:[%s10 + $0x18] sm:$0xf]
  %v825 = vld [vmem:[%s10 + $0x1c] sm:$0xf]
  %v826 = vld [vmem:[%s11] sm:$0x1]
  %v828 = vlaneseq
  %v829 = vshrl.u32 %v828, 7
  %v830 = vsub.s32 0, %v829
  %v831 = vrot.slane %v826, %v830
  %v841 = vunpack.c.l.b16 %v818
  %v842 = vunpack.c.l.b16 %v819
  %v843 = vunpack.c.l.b16 %v820
  %v844 = vunpack.c.l.b16 %v821
  %v845 = vunpack.c.l.b16 %v822
  %v846 = vunpack.c.l.b16 %v823
  %v847 = vunpack.c.l.b16 %v824
  %v848 = vunpack.c.l.b16 %v825
  %v849 = vpack.c.b16 %v842, %v841
  %v850 = vpack.c.b16 %v844, %v843
  %v851 = vpack.c.b16 %v846, %v845
  %v852 = vpack.c.b16 %v848, %v847
  %v857 = vsel %vm233, %v817, 0
  %859 = vmatprep.subr.bf16.mxu0 0
  %860 = vmatpush1.bf16.msra.mxu0 %v849
  %861 = vmatprep.subr.bf16.mxu0 0
  %862 = vmatpush1.bf16.msra.mxu0 %v850
  %863 = vmatprep.subr.bf16.mxu0 0
  %864 = vmatpush1.bf16.msra.mxu0 %v851
  %865 = vmatprep.subr.bf16.mxu0 0
  %866 = vmatpush1.bf16.msra.mxu0 %v852
  %867 = vmatprep.subr.bf16.mxu0 0
  %868 = vmatpush1.bf16.msra.mxu0 0
  %869 = vmatprep.subr.bf16.mxu0 0
  %870 = vmatpush1.bf16.msra.mxu0 0
  %871 = vmatprep.subr.bf16.mxu0 0
  %872 = vmatpush1.bf16.msra.mxu0 0
  %873 = vmatprep.subr.bf16.mxu0 0
  %874 = vmatpush1.bf16.msra.mxu0 0
  %875 = vmatprep.subr.bf16.mxu0 0
  %876 = vmatpush1.bf16.msra.mxu0 0
  %877 = vmatprep.subr.bf16.mxu0 0
  %878 = vmatpush1.bf16.msra.mxu0 0
  %879 = vmatprep.subr.bf16.mxu0 0
  %880 = vmatpush1.bf16.msra.mxu0 0
  %881 = vmatprep.subr.bf16.mxu0 0
  %882 = vmatpush1.bf16.msra.mxu0 0
  %883 = vmatprep.subr.bf16.mxu0 0
  %884 = vmatpush1.bf16.msra.mxu0 0
  %885 = vmatprep.subr.bf16.mxu0 0
  %886 = vmatpush1.bf16.msra.mxu0 0
  %887 = vmatprep.subr.bf16.mxu0 0
  %888 = vmatpush1.bf16.msra.mxu0 0
  %889 = vmatprep.subr.bf16.mxu0 0
  %890 = vmatpush1.bf16.msra.mxu0 0
  %891 = vmatprep.mubr.bf16.mxu0 0
  %892 = vmatmul.mubr.bf16.gmra.mrb[0].mxu0 %v857
  %v893 = vpop.f32.mrb[0].mxu0
  %v894 = vadd.f32 %v831, %v893
  %v895 = vpop.f32.mrb[0].mxu0
  %v896 = vpop.f32.mrb[0].mxu0
  %v897 = vadd.f32 %v831, %v896
  %v898 = vpop.f32.mrb[0].mxu0
  %899 = vdwg.mxu0
  %v900 = vmax.f32 %v894, 0.0
  %v901 = vmax.f32 %v897, 0.0
  %v902 = vpack.c.bf16 %v901, %v900
  %903 = vmatprep.subr.bf16.mxu0 0
  %904 = vmatpush1.bf16.msra.mxu0 %v902
  %905 = vmatprep.subr.bf16.mxu0 0
  %906 = vmatpush1.bf16.msra.mxu0 0
  %907 = vmatprep.subr.bf16.mxu0 0
  %908 = vmatpush1.bf16.msra.mxu0 0
  %909 = vmatprep.subr.bf16.mxu0 0
  %910 = vmatpush1.bf16.msra.mxu0 0
  %911 = vmatprep.subr.bf16.mxu0 0
  %912 = vmatpush1.bf16.msra.mxu0 0
  %913 = vmatprep.subr.bf16.mxu0 0
  %914 = vmatpush1.bf16.msra.mxu0 0
  %915 = vmatprep.subr.bf16.mxu0 0
  %916 = vmatpush1.bf16.msra.mxu0 0
  %917 = vmatprep.subr.bf16.mxu0 0
  %918 = vmatpush1.bf16.msra.mxu0 0
  %919 = vmatprep.subr.bf16.mxu0 0
  %920 = vmatpush1.bf16.msra.mxu0 0
  %921 = vmatprep.subr.bf16.mxu0 0
  %922 = vmatpush1.bf16.msra.mxu0 0
  %923 = vmatprep.subr.bf16.mxu0 0
  %924 = vmatpush1.bf16.msra.mxu0 0
  %925 = vmatprep.subr.bf16.mxu0 0
  %926 = vmatpush1.bf16.msra.mxu0 0
  %927 = vmatprep.subr.bf16.mxu0 0
  %928 = vmatpush1.bf16.msra.mxu0 0
  %929 = vmatprep.subr.bf16.mxu0 0
  %930 = vmatpush1.bf16.msra.mxu0 0
  %931 = vmatprep.subr.bf16.mxu0 0
  %932 = vmatpush1.bf16.msra.mxu0 0
  %933 = vmatprep.subr.bf16.mxu0 0
  %934 = vmatpush1.bf16.msra.mxu0 0
  %935 = vmatprep.mubr.bf16.mxu0 0
  %936 = vmatmul.mubr.bf16.gmra.mrb[0].mxu0 %v152
  %v937 = vpop.f32.mrb[0].mxu0
  %v938 = vadd.f32 0.0, %v937
  %v939 = vpop.f32.mrb[0].mxu0
  %v940 = vpop.f32.mrb[0].mxu0
  %v941 = vadd.f32 0.0, %v940
  %v942 = vpop.f32.mrb[0].mxu0
  %943 = vmatprep.mubr.bf16.mxu0 0
  %944 = vmatmul.mubr.bf16.gmra.mrb[0].mxu0 %v155
  %v945 = vpop.f32.mrb[0].mxu0
  %v946 = vadd.f32 0.0, %v945
  %v947 = vpop.f32.mrb[0].mxu0
  %v948 = vpop.f32.mrb[0].mxu0
  %v949 = vadd.f32 0.0, %v948
  %v950 = vpop.f32.mrb[0].mxu0
  %951 = vmatprep.mubr.bf16.mxu0 0
  %952 = vmatmul.mubr.bf16.gmra.mrb[0].mxu0 %v158
  %v953 = vpop.f32.mrb[0].mxu0
  %v954 = vadd.f32 0.0, %v953
  %v955 = vpop.f32.mrb[0].mxu0
  %v956 = vpop.f32.mrb[0].mxu0
  %v957 = vadd.f32 0.0, %v956
  %v958 = vpop.f32.mrb[0].mxu0
  %959 = vdwg.mxu0
  %v960 = vpack.c.bf16 %v941, %v938
  %v961 = vpack.c.bf16 %v949, %v946
  %v962 = vpack.c.bf16 %v957, %v954
  %964 = vrot.lane.b32.xlu0 %v960, 16
  %v965 = vpop.permute.xlu0 %964
  %967 = vrot.lane.b32.xlu0 %v961, 32
  %v968 = vpop.permute.xlu0 %967
  %970 = vrot.lane.b32.xlu0 %v962, 48
  %v971 = vpop.permute.xlu0 %970
  %v974 = vsel %vm88, %v902, %v965
  %v976 = vsel %vm229, %v974, %v968
  %vm977 = vcmask 392192
  %v979 = vsel %vm977, %v976, %v971
  %v980 = vld [vmem:[%s12] sm:$0xf]
  %v981 = vld [vmem:[%s12 + $0x4] sm:$0xf]
  %v982 = vld [vmem:[%s12 + $0x8] sm:$0xf]
  %v983 = vld [vmem:[%s12 + $0xc] sm:$0xf]
  %v984 = vld [vmem:[%s12 + $0x10] sm:$0xf]
  %v985 = vld [vmem:[%s12 + $0x14] sm:$0xf]
  %v986 = vld [vmem:[%s12 + $0x18] sm:$0xf]
  %v987 = vld [vmem:[%s12 + $0x1c] sm:$0xf]
  %v988 = vld [vmem:[%s13] sm:$0x1]
  %v990 = vlaneseq
  %v991 = vshrl.u32 %v990, 7
  %v992 = vsub.s32 0, %v991
  %v993 = vrot.slane %v988, %v992
  %v1003 = vunpack.c.l.b16 %v980
  %v1004 = vunpack.c.l.b16 %v981
  %v1005 = vunpack.c.l.b16 %v982
  %v1006 = vunpack.c.l.b16 %v983
  %v1007 = vunpack.c.l.b16 %v984
  %v1008 = vunpack.c.l.b16 %v985
  %v1009 = vunpack.c.l.b16 %v986
  %v1010 = vunpack.c.l.b16 %v987
  %v1011 = vpack.c.b16 %v1004, %v1003
  %v1012 = vpack.c.b16 %v1006, %v1005
  %v1013 = vpack.c.b16 %v1008, %v1007
  %v1014 = vpack.c.b16 %v1010, %v1009
  %v1019 = vsel %vm233, %v979, 0
  %1021 = vmatprep.subr.bf16.mxu0 0
  %1022 = vmatpush1.bf16.msra.mxu0 %v1011
  %1023 = vmatprep.subr.bf16.mxu0 0
  %1024 = vmatpush1.bf16.msra.mxu0 %v1012
  %1025 = vmatprep.subr.bf16.mxu0 0
  %1026 = vmatpush1.bf16.msra.mxu0 %v1013
  %1027 = vmatprep.subr.bf16.mxu0 0
  %1028 = vmatpush1.bf16.msra.mxu0 %v1014
  %1029 = vmatprep.subr.bf16.mxu0 0
  %1030 = vmatpush1.bf16.msra.mxu0 0
  %1031 = vmatprep.subr.bf16.mxu0 0
  %1032 = vmatpush1.bf16.msra.mxu0 0
  %1033 = vmatprep.subr.bf16.mxu0 0
  %1034 = vmatpush1.bf16.msra.mxu0 0
  %1035 = vmatprep.subr.bf16.mxu0 0
  %1036 = vmatpush1.bf16.msra.mxu0 0
  %1037 = vmatprep.subr.bf16.mxu0 0
  %1038 = vmatpush1.bf16.msra.mxu0 0
  %1039 = vmatprep.subr.bf16.mxu0 0
  %1040 = vmatpush1.bf16.msra.mxu0 0
  %1041 = vmatprep.subr.bf16.mxu0 0
  %1042 = vmatpush1.bf16.msra.mxu0 0
  %1043 = vmatprep.subr.bf16.mxu0 0
  %1044 = vmatpush1.bf16.msra.mxu0 0
  %1045 = vmatprep.subr.bf16.mxu0 0
  %1046 = vmatpush1.bf16.msra.mxu0 0
  %1047 = vmatprep.subr.bf16.mxu0 0
  %1048 = vmatpush1.bf16.msra.mxu0 0
  %1049 = vmatprep.subr.bf16.mxu0 0
  %1050 = vmatpush1.bf16.msra.mxu0 0
  %1051 = vmatprep.subr.bf16.mxu0 0
  %1052 = vmatpush1.bf16.msra.mxu0 0
  %1053 = vmatprep.mubr.bf16.mxu0 0
  %1054 = vmatmul.mubr.bf16.gmra.mrb[0].mxu0 %v1019
  %v1055 = vpop.f32.mrb[0].mxu0
  %v1056 = vadd.f32 %v993, %v1055
  %v1057 = vpop.f32.mrb[0].mxu0
  %v1058 = vpop.f32.mrb[0].mxu0
  %v1059 = vadd.f32 %v993, %v1058
  %v1060 = vpop.f32.mrb[0].mxu0
  %1061 = vdwg.mxu0
  %v1062 = vmax.f32 %v1056, 0.0
  %v1063 = vmax.f32 %v1059, 0.0
  %v1064 = vpack.c.bf16 %v1063, %v1062
  %1065 = vmatprep.subr.bf16.mxu0 0
  %1066 = vmatpush1.bf16.msra.mxu0 %v1064
  %1067 = vmatprep.subr.bf16.mxu0 0
  %1068 = vmatpush1.bf16.msra.mxu0 0
  %1069 = vmatprep.subr.bf16.mxu0 0
  %1070 = vmatpush1.bf16.msra.mxu0 0
  %1071 = vmatprep.subr.bf16.mxu0 0
  %1072 = vmatpush1.bf16.msra.mxu0 0
  %1073 = vmatprep.subr.bf16.mxu0 0
  %1074 = vmatpush1.bf16.msra.mxu0 0
  %1075 = vmatprep.subr.bf16.mxu0 0
  %1076 = vmatpush1.bf16.msra.mxu0 0
  %1077 = vmatprep.subr.bf16.mxu0 0
  %1078 = vmatpush1.bf16.msra.mxu0 0
  %1079 = vmatprep.subr.bf16.mxu0 0
  %1080 = vmatpush1.bf16.msra.mxu0 0
  %1081 = vmatprep.subr.bf16.mxu0 0
  %1082 = vmatpush1.bf16.msra.mxu0 0
  %1083 = vmatprep.subr.bf16.mxu0 0
  %1084 = vmatpush1.bf16.msra.mxu0 0
  %1085 = vmatprep.subr.bf16.mxu0 0
  %1086 = vmatpush1.bf16.msra.mxu0 0
  %1087 = vmatprep.subr.bf16.mxu0 0
  %1088 = vmatpush1.bf16.msra.mxu0 0
  %1089 = vmatprep.subr.bf16.mxu0 0
  %1090 = vmatpush1.bf16.msra.mxu0 0
  %1091 = vmatprep.subr.bf16.mxu0 0
  %1092 = vmatpush1.bf16.msra.mxu0 0
  %1093 = vmatprep.subr.bf16.mxu0 0
  %1094 = vmatpush1.bf16.msra.mxu0 0
  %1095 = vmatprep.subr.bf16.mxu0 0
  %1096 = vmatpush1.bf16.msra.mxu0 0
  %1097 = vmatprep.mubr.bf16.mxu0 0
  %1098 = vmatmul.mubr.bf16.gmra.mrb[0].mxu0 %v152
  %v1099 = vpop.f32.mrb[0].mxu0
  %v1100 = vadd.f32 0.0, %v1099
  %v1101 = vpop.f32.mrb[0].mxu0
  %v1102 = vpop.f32.mrb[0].mxu0
  %v1103 = vadd.f32 0.0, %v1102
  %v1104 = vpop.f32.mrb[0].mxu0
  %1105 = vmatprep.mubr.bf16.mxu0 0
  %1106 = vmatmul.mubr.bf16.gmra.mrb[0].mxu0 %v155
  %v1107 = vpop.f32.mrb[0].mxu0
  %v1108 = vadd.f32 0.0, %v1107
  %v1109 = vpop.f32.mrb[0].mxu0
  %v1110 = vpop.f32.mrb[0].mxu0
  %v1111 = vadd.f32 0.0, %v1110
  %v1112 = vpop.f32.mrb[0].mxu0
  %1113 = vmatprep.mubr.bf16.mxu0 0
  %1114 = vmatmul.mubr.bf16.gmra.mrb[0].mxu0 %v158
  %v1115 = vpop.f32.mrb[0].mxu0
  %v1116 = vadd.f32 0.0, %v1115
  %v1117 = vpop.f32.mrb[0].mxu0
  %v1118 = vpop.f32.mrb[0].mxu0
  %v1119 = vadd.f32 0.0, %v1118
  %v1120 = vpop.f32.mrb[0].mxu0
  %1121 = vdwg.mxu0
  %v1122 = vpack.c.bf16 %v1103, %v1100
  %v1123 = vpack.c.bf16 %v1111, %v1108
  %v1124 = vpack.c.bf16 %v1119, %v1116
  %1126 = vrot.lane.b32.xlu0 %v1122, 16
  %v1127 = vpop.permute.xlu0 %1126
  %1129 = vrot.lane.b32.xlu0 %v1123, 32
  %v1130 = vpop.permute.xlu0 %1129
  %1132 = vrot.lane.b32.xlu0 %v1124, 48
  %v1133 = vpop.permute.xlu0 %1132
  %v1136 = vsel %vm88, %v1064, %v1127
  %v1138 = vsel %vm229, %v1136, %v1130
  %v1140 = vsel %vm977, %v1138, %v1133
  %v1141 = vld [vmem:[%s14] sm:$0xf]
  %v1142 = vld [vmem:[%s14 + $0x4] sm:$0xf]
  %v1143 = vld [vmem:[%s14 + $0x8] sm:$0xf]
  %v1144 = vld [vmem:[%s14 + $0xc] sm:$0xf]
  %v1145 = vld [vmem:[%s14 + $0x10] sm:$0xf]
  %v1146 = vld [vmem:[%s14 + $0x14] sm:$0xf]
  %v1147 = vld [vmem:[%s14 + $0x18] sm:$0xf]
  %v1148 = vld [vmem:[%s14 + $0x1c] sm:$0xf]
  %v1149 = vld [vmem:[%s15] sm:$0x1]
  %v1151 = vlaneseq
  %v1152 = vshrl.u32 %v1151, 7
  %v1153 = vsub.s32 0, %v1152
  %v1154 = vrot.slane %v1149, %v1153
  %v1164 = vunpack.c.l.b16 %v1141
  %v1165 = vunpack.c.l.b16 %v1142
  %v1166 = vunpack.c.l.b16 %v1143
  %v1167 = vunpack.c.l.b16 %v1144
  %v1168 = vunpack.c.l.b16 %v1145
  %v1169 = vunpack.c.l.b16 %v1146
  %v1170 = vunpack.c.l.b16 %v1147
  %v1171 = vunpack.c.l.b16 %v1148
  %v1172 = vpack.c.b16 %v1165, %v1164
  %v1173 = vpack.c.b16 %v1167, %v1166
  %v1174 = vpack.c.b16 %v1169, %v1168
  %v1175 = vpack.c.b16 %v1171, %v1170
  %v1180 = vsel %vm233, %v1140, 0
  %1182 = vmatprep.subr.bf16.mxu0 0
  %1183 = vmatpush1.bf16.msra.mxu0 %v1172
  %1184 = vmatprep.subr.bf16.mxu0 0
  %1185 = vmatpush1.bf16.msra.mxu0 %v1173
  %1186 = vmatprep.subr.bf16.mxu0 0
  %1187 = vmatpush1.bf16.msra.mxu0 %v1174
  %1188 = vmatprep.subr.bf16.mxu0 0
  %1189 = vmatpush1.bf16.msra.mxu0 %v1175
  %1190 = vmatprep.subr.bf16.mxu0 0
  %1191 = vmatpush1.bf16.msra.mxu0 0
  %1192 = vmatprep.subr.bf16.mxu0 0
  %1193 = vmatpush1.bf16.msra.mxu0 0
  %1194 = vmatprep.subr.bf16.mxu0 0
  %1195 = vmatpush1.bf16.msra.mxu0 0
  %1196 = vmatprep.subr.bf16.mxu0 0
  %1197 = vmatpush1.bf16.msra.mxu0 0
  %1198 = vmatprep.subr.bf16.mxu0 0
  %1199 = vmatpush1.bf16.msra.mxu0 0
  %1200 = vmatprep.subr.bf16.mxu0 0
  %1201 = vmatpush1.bf16.msra.mxu0 0
  %1202 = vmatprep.subr.bf16.mxu0 0
  %1203 = vmatpush1.bf16.msra.mxu0 0
  %1204 = vmatprep.subr.bf16.mxu0 0
  %1205 = vmatpush1.bf16.msra.mxu0 0
  %1206 = vmatprep.subr.bf16.mxu0 0
  %1207 = vmatpush1.bf16.msra.mxu0 0
  %1208 = vmatprep.subr.bf16.mxu0 0
  %1209 = vmatpush1.bf16.msra.mxu0 0
  %1210 = vmatprep.subr.bf16.mxu0 0
  %1211 = vmatpush1.bf16.msra.mxu0 0
  %1212 = vmatprep.subr.bf16.mxu0 0
  %1213 = vmatpush1.bf16.msra.mxu0 0
  %1214 = vmatprep.mubr.bf16.mxu0 0
  %1215 = vmatmul.mubr.bf16.gmra.mrb[0].mxu0 %v1180
  %v1216 = vpop.f32.mrb[0].mxu0
  %v1217 = vadd.f32 %v1154, %v1216
  %v1218 = vpop.f32.mrb[0].mxu0
  %v1219 = vpop.f32.mrb[0].mxu0
  %v1220 = vadd.f32 %v1154, %v1219
  %v1221 = vpop.f32.mrb[0].mxu0
  %1222 = vdwg.mxu0
  %v1223 = vmax.f32 %v1217, 0.0
  %v1224 = vmax.f32 %v1220, 0.0
  %v1225 = vpack.c.bf16 %v1224, %v1223
  %v1226 = vld [vmem:[%s16] sm:$0xf]
  %v1227 = vld [vmem:[%s16 + $0x4] sm:$0xf]
  %v1228 = vld [vmem:[%s17] sm:$0x1]
  %v1230 = vlaneseq
  %v1231 = vshrl.u32 %v1230, 7
  %v1232 = vsub.s32 0, %v1231
  %v1233 = vrot.slane %v1228, %v1232
  %v1237 = vunpack.c.l.b16 %v1226
  %v1238 = vunpack.c.l.b16 %v1227
  %v1239 = vpack.c.b16 %v1238, %v1237
  %v1242 = vsel %vm88, %v1225, 0
  %1244 = vmatprep.subr.bf16.mxu0 0
  %1245 = vmatpush1.bf16.msra.mxu0 %v1239
  %1246 = vmatprep.subr.bf16.mxu0 0
  %1247 = vmatpush1.bf16.msra.mxu0 0
  %1248 = vmatprep.subr.bf16.mxu0 0
  %1249 = vmatpush1.bf16.msra.mxu0 0
  %1250 = vmatprep.subr.bf16.mxu0 0
  %1251 = vmatpush1.bf16.msra.mxu0 0
  %1252 = vmatprep.subr.bf16.mxu0 0
  %1253 = vmatpush1.bf16.msra.mxu0 0
  %1254 = vmatprep.subr.bf16.mxu0 0
  %1255 = vmatpush1.bf16.msra.mxu0 0
  %1256 = vmatprep.subr.bf16.mxu0 0
  %1257 = vmatpush1.bf16.msra.mxu0 0
  %1258 = vmatprep.subr.bf16.mxu0 0
  %1259 = vmatpush1.bf16.msra.mxu0 0
  %1260 = vmatprep.subr.bf16.mxu0 0
  %1261 = vmatpush1.bf16.msra.mxu0 0
  %1262 = vmatprep.subr.bf16.mxu0 0
  %1263 = vmatpush1.bf16.msra.mxu0 0
  %1264 = vmatprep.subr.bf16.mxu0 0
  %1265 = vmatpush1.bf16.msra.mxu0 0
  %1266 = vmatprep.subr.bf16.mxu0 0
  %1267 = vmatpush1.bf16.msra.mxu0 0
  %1268 = vmatprep.subr.bf16.mxu0 0
  %1269 = vmatpush1.bf16.msra.mxu0 0
  %1270 = vmatprep.subr.bf16.mxu0 0
  %1271 = vmatpush1.bf16.msra.mxu0 0
  %1272 = vmatprep.subr.bf16.mxu0 0
  %1273 = vmatpush1.bf16.msra.mxu0 0
  %1274 = vmatprep.subr.bf16.mxu0 0
  %1275 = vmatpush1.bf16.msra.mxu0 0
  %1276 = vmatprep.mubr.bf16.mxu0 0
  %1277 = vmatmul.mubr.bf16.gmra.mrb[0].mxu0 %v1242
  %v1278 = vpop.f32.mrb[0].mxu0
  %v1279 = vadd.f32 %v1233, %v1278
  %v1280 = vpop.f32.mrb[0].mxu0
  %v1281 = vpop.f32.mrb[0].mxu0
  %v1282 = vadd.f32 %v1233, %v1281
  %v1283 = vpop.f32.mrb[0].mxu0
  %1284 = vdwg.mxu0
  %1285 = vst [vmem:[%s18] sm:$0xff] %v1279
  %1286 = vst [vmem:[%s18 + $0x8] sm:$0xff] %v1282
  // Predicated region
  $region74: #{robust_filter_graph_cnn_forward.1} parent=0 // pred_check
    _
  $region75: #{robust_filter_graph_cnn_forward.1} parent=0 // pred_check_branch
    %1288 = sbr.rel (0) target = $region77
  $region76: #{robust_filter_graph_cnn_forward.1} parent=0 // pred_region
    _
  $region77: #{robust_filter_graph_cnn_forward.1} parent=0 // pred_fallthru
    _
  // Predicated region
  $region78: #{robust_filter_graph_cnn_forward.1} parent=0 // pred_check
    _
  $region79: #{robust_filter_graph_cnn_forward.1} parent=0 // pred_check_branch
    %1290 = sbr.rel (0) target = $region81
  $region80: #{robust_filter_graph_cnn_forward.1} parent=0 // pred_region
    _
  $region81: #{robust_filter_graph_cnn_forward.1} parent=0 // pred_fallthru
    _

</llo_original>
